<compile_context>
chip_gen: v5e
topology: v5e:2x2
jax: 0.10.0
libtpu: 0.0.40
codegen_flags: <defaults>
</compile_context>

<pallas_src>
import functools

import jax
import jax.numpy as jnp
from jax import lax
from jax.experimental import pallas as pl
from jax.experimental.pallas import tpu as pltpu


def _basic_block_kernel(*refs, Bt, H, W, Cin, Cout, Ho, Wo, Np, stride,
                        equal_in_out, im2col_1, im2col_2):
    """One batch tile (Bt images) per grid step."""
    if equal_in_out:
        (x_ref, a1_ref, b1_ref, w1_ref, a2_ref, b2_ref, w2_ref,
         o_ref, scr1, scr2) = refs
        ws_ref = None
    else:
        (x_ref, a1_ref, b1_ref, w1_ref, a2_ref, b2_ref, w2_ref, ws_ref,
         o_ref, scr1, scr2) = refs

    f32 = jnp.float32
    M = Bt * Ho * Wo

    # ---- bn1 + relu1 (inference BN folded to per-channel affine) ------------
    h1 = jnp.maximum(x_ref[...] * a1_ref[...] + b1_ref[...], 0.0)

    # ---- stage conv1 input so every 3x3 tap window is a contiguous slice ----
    # Only the thin zero halo strips are (re)written each step; interiors are
    # fully rewritten every step.  (Per-step halo zeroing is kept deliberately:
    # with a "parallel" grid axis, a program_id==0 guard would only initialize
    # one TensorCore's scratch.)
    if stride == 2:
        # x block is the space-to-batch phase tensor (4, Bt, Ho, Wo, Cin),
        # phase p = 2*py + px holding x[:, 2i+py, 2j+px, :].  scr1 adds a
        # single zero top row / left column of halo per phase.
        scr1[:, :, 0:1, :, :] = jnp.zeros((4, Bt, 1, Wo + 1, Cin), f32)
        scr1[:, :, :, 0:1, :] = jnp.zeros((4, Bt, Ho + 1, 1, Cin), f32)
        scr1[:, :, 1:Ho + 1, 1:Wo + 1, :] = h1

        def conv1_window(ky, kx):
            # input row 2*oy + ky - 1 -> phase py, grid row oy + (ky==0 ? -1 : 0)
            py = 0 if ky == 1 else 1
            px = 0 if kx == 1 else 1
            r0 = 0 if ky == 0 else 1
            c0 = 0 if kx == 0 else 1
            return scr1[2 * py + px, :, r0:r0 + Ho, c0:c0 + Wo, :]

        sc_in = h1[0]                       # phase (0,0): rows 2i, cols 2j
    else:
        # x block is (Bt, H, W, Cin); scr1 is the classic zero-padded image.
        scr1[:, 0:1, :, :] = jnp.zeros((Bt, 1, W + 2, Cin), f32)
        scr1[:, H + 1:H + 2, :, :] = jnp.zeros((Bt, 1, W + 2, Cin), f32)
        scr1[:, :, 0:1, :] = jnp.zeros((Bt, H + 2, 1, Cin), f32)
        scr1[:, :, W + 1:W + 2, :] = jnp.zeros((Bt, H + 2, 1, Cin), f32)
        scr1[:, 1:H + 1, 1:W + 1, :] = h1

        def conv1_window(ky, kx):
            return scr1[:, ky:ky + Ho, kx:kx + Wo, :]

        # identity residual uses raw x; projected residual uses h1
        sc_in = x_ref[...] if equal_in_out else h1

    # ---- conv1 ---------------------------------------------------------------
    if im2col_1:
        # One (M, 9*Cin) x (9*Cin, Cout) matmul (im2col along K).
        cols = [conv1_window(ky, kx).reshape(M, Cin)
                for ky in range(3) for kx in range(3)]
        im1 = jnp.concatenate(cols, axis=-1)                       # (M, 9*Cin)
        pre2 = jnp.dot(im1, w1_ref[...], preferred_element_type=f32)
    else:
        # Large-C fallback: 9 accumulated (M, Cin) x (Cin, Cout) matmuls.
        pre2 = jnp.zeros((M, Cout), f32)
        for k in range(9):
            ky, kx = divmod(k, 3)
            win = conv1_window(ky, kx).reshape(M, Cin)
            pre2 = pre2 + jnp.dot(win, w1_ref[k * Cin:(k + 1) * Cin, :],
                                  preferred_element_type=f32)

    # ---- bn2 + relu2 ---------------------------------------------------------
    h2 = jnp.maximum(pre2 * a2_ref[...] + b2_ref[...], 0.0)        # (M, Cout)

    # ---- shortcut ------------------------------------------------------------
    if equal_in_out:
        # Identity residual: plain VPU add (lane-padded to Np) -- no eye matmul.
        res = sc_in.reshape(M, Cin)
        if Np > Cout:
            res = jnp.concatenate([res, jnp.zeros((M, Np - Cout), f32)], axis=-1)
    else:
        # 1x1 projection shortcut on the MXU (weights N-padded to Np lanes).
        res = jnp.dot(sc_in.reshape(M, Cin), ws_ref[...],
                      preferred_element_type=f32)                  # (M, Np)

    # ---- conv2: 3x3, stride 1, pad 1 (N padded to Np lanes) ------------------
    scr2[:, 0:1, :, :] = jnp.zeros((Bt, 1, Wo + 2, Cout), f32)
    scr2[:, Ho + 1:Ho + 2, :, :] = jnp.zeros((Bt, 1, Wo + 2, Cout), f32)
    scr2[:, :, 0:1, :] = jnp.zeros((Bt, Ho + 2, 1, Cout), f32)
    scr2[:, :, Wo + 1:Wo + 2, :] = jnp.zeros((Bt, Ho + 2, 1, Cout), f32)
    scr2[:, 1:Ho + 1, 1:Wo + 1, :] = h2.reshape(Bt, Ho, Wo, Cout)

    def conv2_window(ky, kx):
        return scr2[:, ky:ky + Ho, kx:kx + Wo, :].reshape(M, Cout)

    if im2col_2:
        cols2 = [conv2_window(ky, kx) for ky in range(3) for kx in range(3)]
        im2 = jnp.concatenate(cols2, axis=-1)                      # (M, 9*Cout)
        conv2_out = jnp.dot(im2, w2_ref[...], preferred_element_type=f32)
        # Lane-dense (M, Np) store; wrapper slices the valid Cout channels.
        o_ref[...] = (res + conv2_out).astype(o_ref.dtype)
    else:
        # Large-C fallback: accumulate directly into the VMEM output block
        # (no separate (M, Np) f32 accumulator).
        o_ref[...] = res.astype(o_ref.dtype)
        for k in range(9):
            ky, kx = divmod(k, 3)
            o_ref[...] += jnp.dot(conv2_window(ky, kx),
                                  w2_ref[k * Cout:(k + 1) * Cout, :],
                                  preferred_element_type=f32).astype(o_ref.dtype)


def basic_block_forward(x_nchw, params, *, stride, drop_rate=0.0, eps=1e-5):
    """params = (g1, b1, mean1, var1, conv1_w, g2, b2, mean2, var2, conv2_w, shortcut_w)"""
    g1, be1, m1, v1, w1, g2, be2, m2, v2, w2, ws = params
    B, Cin, H, W = x_nchw.shape
    Cout = w1.shape[0]
    equal_in_out = (Cin == Cout)
    assert drop_rate == 0.0, "dropRate > 0 not supported (TODO(synk))"
    assert stride in (1, 2)
    if stride != 1:
        assert not equal_in_out, "stride>1 block must use a projection shortcut"
        assert H % 2 == 0 and W % 2 == 0
    Ho = (H - 1) // stride + 1
    Wo = (W - 1) // stride + 1
    Np = ((Cout + 127) // 128) * 128        # lane-dense padded output width

    # im2col (single big matmul) only pays off while 9*C stays MXU-friendly.
    im2col_1 = Cin < 128
    im2col_2 = Cout < 128

    # Batch tile: grow M toward ~2048 rows to amortize per-step overhead, but
    # cap at B//2 so the grid has >= 2 steps (both v7x TensorCores get work).
    bt_cap = max(1, 2048 // (Ho * Wo))
    if B >= 2:
        bt_cap = min(bt_cap, B // 2)
    Bt = 1
    for cand in range(min(B, bt_cap), 0, -1):
        if B % cand == 0:
            Bt = cand
            break
    M = Bt * Ho * Wo

    # Fold inference-mode BatchNorm into per-channel affine: y = a*x + b.
    inv1 = g1 / jnp.sqrt(v1 + eps)
    inv2 = g2 / jnp.sqrt(v2 + eps)
    a1 = inv1.reshape(1, Cin).astype(jnp.float32)
    b1 = (be1 - m1 * inv1).reshape(1, Cin).astype(jnp.float32)
    a2 = inv2.reshape(1, Cout).astype(jnp.float32)
    b2 = (be2 - m2 * inv2).reshape(1, Cout).astype(jnp.float32)

    # Conv weights: PyTorch OIHW -> matmul form with tap-major K = (k, cin),
    # k = 3*ky + kx (matches the in-kernel im2col column order).
    # conv2 / shortcut weights are zero-padded on N to Np for lane-dense output.
    w1k = jnp.transpose(w1, (2, 3, 1, 0)).reshape(9 * Cin, Cout).astype(jnp.float32)
    w2k = jnp.transpose(w2, (2, 3, 1, 0)).reshape(9 * Cout, Cout).astype(jnp.float32)
    w2k = jnp.pad(w2k, ((0, 0), (0, Np - Cout)))

    x_nhwc = jnp.transpose(x_nchw, (0, 2, 3, 1)).astype(jnp.float32)
    if stride == 2:
        # Space-to-batch the input: phase p = 2*py + px holds x[:, 2i+py, 2j+px, :],
        # so every stride-2 tap window is a contiguous slice in-kernel.
        x_in = x_nhwc.reshape(B, Ho, 2, Wo, 2, Cin)
        x_in = jnp.transpose(x_in, (2, 4, 0, 1, 3, 5)).reshape(4, B, Ho, Wo, Cin)
        x_spec = pl.BlockSpec((4, Bt, Ho, Wo, Cin), lambda b: (0, b, 0, 0, 0))
        x_block = (4, Bt, Ho, Wo, Cin)
        scr1_shape = (4, Bt, Ho + 1, Wo + 1, Cin)
    else:
        x_in = x_nhwc
        x_spec = pl.BlockSpec((Bt, H, W, Cin), lambda b: (b, 0, 0, 0))
        x_block = (Bt, H, W, Cin)
        scr1_shape = (Bt, H + 2, W + 2, Cin)
    scr2_shape = (Bt, Ho + 2, Wo + 2, Cout)

    args = [x_in, a1, b1, w1k, a2, b2, w2k]
    in_specs = [
        x_spec,                                                # x / phases
        pl.BlockSpec((1, Cin), lambda b: (0, 0)),              # bn1 scale
        pl.BlockSpec((1, Cin), lambda b: (0, 0)),              # bn1 shift
        pl.BlockSpec((9 * Cin, Cout), lambda b: (0, 0)),       # conv1 w
        pl.BlockSpec((1, Cout), lambda b: (0, 0)),             # bn2 scale
        pl.BlockSpec((1, Cout), lambda b: (0, 0)),             # bn2 shift
        pl.BlockSpec((9 * Cout, Np), lambda b: (0, 0)),        # conv2 w (N-padded)
    ]
    if not equal_in_out:
        wsk = jnp.transpose(ws[:, :, 0, 0], (1, 0)).astype(jnp.float32)
        wsk = jnp.pad(wsk, ((0, 0), (0, Np - Cout)))
        args.append(wsk)
        in_specs.append(pl.BlockSpec((Cin, Np), lambda b: (0, 0)))  # shortcut w

    kernel = functools.partial(
        _basic_block_kernel, Bt=Bt, H=H, W=W, Cin=Cin, Cout=Cout, Ho=Ho, Wo=Wo,
        Np=Np, stride=stride, equal_in_out=equal_in_out,
        im2col_1=im2col_1, im2col_2=im2col_2)

    # Advisory cost estimate for XLA's scheduler.
    flops = 2 * B * Ho * Wo * (9 * Cin * Cout + 9 * Cout * Cout)
    if not equal_in_out:
        flops += 2 * B * Ho * Wo * Cin * Cout
    bytes_accessed = 4 * (x_in.size + a1.size + b1.size + w1k.size + a2.size
                          + b2.size + w2k.size + B * Ho * Wo * Np)
    if not equal_in_out:
        bytes_accessed += 4 * args[-1].size

    # Explicit VMEM limit (defaults: 16 MiB v5e / 32 MiB v6e,v7x scoped).
    def _prod(shape):
        n = 1
        for d in shape:
            n *= d
        return n
    block_shapes = [x_block, (1, Cin), (1, Cin), (9 * Cin, Cout), (1, Cout),
                    (1, Cout), (9 * Cout, Np), (M, Np)]
    if not equal_in_out:
        block_shapes.append((Cin, Np))
    vmem_need = 2 * sum(4 * _prod(s) for s in block_shapes)          # double-buffered
    vmem_need += 4 * (_prod(scr1_shape) + _prod(scr2_shape))         # scratch
    vmem_limit = int(min(max(2 * vmem_need, 32 * 1024 * 1024), 64 * 1024 * 1024))

    out_flat = pl.pallas_call(
        kernel,
        out_shape=jax.ShapeDtypeStruct((B * Ho * Wo, Np), jnp.float32),
        grid_spec=pltpu.PrefetchScalarGridSpec(
            num_scalar_prefetch=0,
            grid=(B // Bt,),
            in_specs=in_specs,
            out_specs=pl.BlockSpec((M, Np), lambda b: (b, 0)),
            scratch_shapes=[
                pltpu.VMEM(scr1_shape, jnp.float32),                 # conv1 staging
                pltpu.VMEM(scr2_shape, jnp.float32),                 # conv2 staging
            ],
        ),
        compiler_params=pltpu.CompilerParams(
            dimension_semantics=("parallel",),
            vmem_limit_bytes=vmem_limit),
        cost_estimate=pl.CostEstimate(flops=int(flops), transcendentals=0,
                                      bytes_accessed=int(bytes_accessed)),
    )(*args)

    out_nhwc = out_flat[:, :Cout].reshape(B, Ho, Wo, Cout)
    return jnp.transpose(out_nhwc, (0, 3, 1, 2))   # back to NCHW


def reference_forward(x, params, *, stride, eps=1e-5):
    """Pure-JAX NCHW reference mirroring the PyTorch forward (eval-mode BN)."""
    g1, be1, m1, v1, w1, g2, be2, m2, v2, w2, ws = params

    def bn(x, g, b, m, v):
        s = (g / jnp.sqrt(v + eps))[None, :, None, None]
        return (x - m[None, :, None, None]) * s + b[None, :, None, None]

    def conv(x, w, s, p):
        return lax.conv_general_dilated(
            x, w, window_strides=(s, s), padding=[(p, p), (p, p)],
            dimension_numbers=('NCHW', 'OIHW', 'NCHW'))

    equal = (w1.shape[0] == w1.shape[1])
    a = jax.nn.relu(bn(x, g1, be1, m1, v1))
    short = x if equal else conv(a, ws, stride, 0)
    out = conv(a, w1, stride, 1)
    out = jax.nn.relu(bn(out, g2, be2, m2, v2))
    out = conv(out, w2, 1, 1)
    return short + out


if __name__ == "__main__":
    # BasicBlock(in_planes=4, out_planes=8, stride=2, dropRate=0.0)
    B, Cin, Cout, H, W, stride = 2, 4, 8, 16, 16, 2
    key = jax.random.PRNGKey(0)
    ks = jax.random.split(key, 12)

    x = jax.random.normal(ks[0], (B, Cin, H, W), jnp.float32)
    g1 = 1.0 + 0.1 * jax.random.normal(ks[1], (Cin,), jnp.float32)
    be1 = 0.1 * jax.random.normal(ks[2], (Cin,), jnp.float32)
    m1 = 0.1 * jax.random.normal(ks[3], (Cin,), jnp.float32)
    v1 = jax.random.uniform(ks[4], (Cin,), jnp.float32, 0.5, 1.5)
    w1 = 0.2 * jax.random.normal(ks[5], (Cout, Cin, 3, 3), jnp.float32)
    g2 = 1.0 + 0.1 * jax.random.normal(ks[6], (Cout,), jnp.float32)
    be2 = 0.1 * jax.random.normal(ks[7], (Cout,), jnp.float32)
    m2 = 0.1 * jax.random.normal(ks[8], (Cout,), jnp.float32)
    v2 = jax.random.uniform(ks[9], (Cout,), jnp.float32, 0.5, 1.5)
    w2 = 0.2 * jax.random.normal(ks[10], (Cout, Cout, 3, 3), jnp.float32)
    ws = 0.2 * jax.random.normal(ks[11], (Cout, Cin, 1, 1), jnp.float32)
    params = (g1, be1, m1, v1, w1, g2, be2, m2, v2, w2, ws)

    out = basic_block_forward(x, params, stride=stride)
    out = jax.block_until_ready(out)

    ref = reference_forward(x, params, stride=stride)
    assert out.shape == ref.shape == (B, Cout, H // stride, W // stride)
    max_err = float(jnp.max(jnp.abs(out - ref)))
    assert jnp.allclose(out, ref, atol=2e-3, rtol=2e-3), f"max abs err {max_err}"
    print("KERNEL_OK")
</pallas_src>

<mosaic_0001>
module attributes {stable_mosaic.version = 11 : i64} {
  func.func @_basic_block_kernel(%arg0: i32, %arg1: memref<4x1x8x8x4xf32, #tpu.memory_space<vmem>>, %arg2: memref<1x4xf32, #tpu.memory_space<vmem>>, %arg3: memref<1x4xf32, #tpu.memory_space<vmem>>, %arg4: memref<36x8xf32, #tpu.memory_space<vmem>>, %arg5: memref<1x8xf32, #tpu.memory_space<vmem>>, %arg6: memref<1x8xf32, #tpu.memory_space<vmem>>, %arg7: memref<72x128xf32, #tpu.memory_space<vmem>>, %arg8: memref<4x128xf32, #tpu.memory_space<vmem>>, %arg9: memref<64x128xf32, #tpu.memory_space<vmem>>, %arg10: memref<4x1x9x9x4xf32, #tpu.memory_space<vmem>>, %arg11: memref<1x10x10x8xf32, #tpu.memory_space<vmem>>) attributes {dimension_semantics = [#tpu.dimension_semantics<parallel>], iteration_bounds = array<i64: 2>, scalar_prefetch = 0 : i64, scratch_operands = 2 : i64, tpu.core_type = #tpu.core_type<tc>, window_params = [{transform_indices = @transform_0, window_bounds = array<i64: 4, 1, 8, 8, 4>}, {pipeline_mode = #tpu.pipeline_mode<synchronous>, transform_indices = @transform_1, window_bounds = array<i64: 1, 4>}, {pipeline_mode = #tpu.pipeline_mode<synchronous>, transform_indices = @transform_2, window_bounds = array<i64: 1, 4>}, {pipeline_mode = #tpu.pipeline_mode<synchronous>, transform_indices = @transform_3, window_bounds = array<i64: 36, 8>}, {pipeline_mode = #tpu.pipeline_mode<synchronous>, transform_indices = @transform_4, window_bounds = array<i64: 1, 8>}, {pipeline_mode = #tpu.pipeline_mode<synchronous>, transform_indices = @transform_5, window_bounds = array<i64: 1, 8>}, {pipeline_mode = #tpu.pipeline_mode<synchronous>, transform_indices = @transform_6, window_bounds = array<i64: 72, 128>}, {pipeline_mode = #tpu.pipeline_mode<synchronous>, transform_indices = @transform_7, window_bounds = array<i64: 4, 128>}, {transform_indices = @transform_8, window_bounds = array<i64: 64, 128>}]} {
    %c0 = arith.constant 0 : index
    %c0_0 = arith.constant 0 : index
    %c0_1 = arith.constant 0 : index
    %c0_2 = arith.constant 0 : index
    %c0_3 = arith.constant 0 : index
    %0 = vector.load %arg1[%c0, %c0_0, %c0_1, %c0_2, %c0_3] : memref<4x1x8x8x4xf32, #tpu.memory_space<vmem>>, vector<4x1x8x8x4xf32>
    %c0_4 = arith.constant 0 : index
    %c0_5 = arith.constant 0 : index
    %1 = vector.load %arg2[%c0_4, %c0_5] : memref<1x4xf32, #tpu.memory_space<vmem>>, vector<1x4xf32>
    %2 = vector.shape_cast %1 : vector<1x4xf32> to vector<1x1x1x1x4xf32>
    %3 = vector.broadcast %2 : vector<1x1x1x1x4xf32> to vector<4x1x8x8x4xf32>
    %4 = arith.mulf %0, %3 : vector<4x1x8x8x4xf32>
    %c0_6 = arith.constant 0 : index
    %c0_7 = arith.constant 0 : index
    %5 = vector.load %arg3[%c0_6, %c0_7] : memref<1x4xf32, #tpu.memory_space<vmem>>, vector<1x4xf32>
    %6 = vector.shape_cast %5 : vector<1x4xf32> to vector<1x1x1x1x4xf32>
    %7 = vector.broadcast %6 : vector<1x1x1x1x4xf32> to vector<4x1x8x8x4xf32>
    %8 = arith.addf %4, %7 : vector<4x1x8x8x4xf32>
    %cst = arith.constant 0.000000e+00 : f32
    %9 = vector.broadcast %cst : f32 to vector<4x1x8x8x4xf32>
    %10 = arith.maximumf %8, %9 : vector<4x1x8x8x4xf32>
    %cst_8 = arith.constant 0.000000e+00 : f32
    %11 = vector.broadcast %cst_8 : f32 to vector<4x1x1x9x4xf32>
    %c0_9 = arith.constant 0 : index
    %c0_10 = arith.constant 0 : index
    %c0_11 = arith.constant 0 : index
    %c0_12 = arith.constant 0 : index
    %c0_13 = arith.constant 0 : index
    %12 = vector.load %arg10[%c0_9, %c0_10, %c0_11, %c0_12, %c0_13] : memref<4x1x9x9x4xf32, #tpu.memory_space<vmem>>, vector<4x1x1x9x4xf32>
    tpu.vector_store %arg10[%c0_9, %c0_10, %c0_11, %c0_12, %c0_13], %11 {strides = array<i32>} : memref<4x1x9x9x4xf32, #tpu.memory_space<vmem>>, vector<4x1x1x9x4xf32>,
    %cst_14 = arith.constant 0.000000e+00 : f32
    %13 = vector.broadcast %cst_14 : f32 to vector<4x1x9x1x4xf32>
    %c0_15 = arith.constant 0 : index
    %c0_16 = arith.constant 0 : index
    %c0_17 = arith.constant 0 : index
    %c0_18 = arith.constant 0 : index
    %c0_19 = arith.constant 0 : index
    %14 = vector.load %arg10[%c0_15, %c0_16, %c0_17, %c0_18, %c0_19] : memref<4x1x9x9x4xf32, #tpu.memory_space<vmem>>, vector<4x1x9x1x4xf32>
    tpu.vector_store %arg10[%c0_15, %c0_16, %c0_17, %c0_18, %c0_19], %13 {strides = array<i32>} : memref<4x1x9x9x4xf32, #tpu.memory_space<vmem>>, vector<4x1x9x1x4xf32>,
    %c0_20 = arith.constant 0 : index
    %c0_21 = arith.constant 0 : index
    %c1 = arith.constant 1 : index
    %c1_22 = arith.constant 1 : index
    %c0_23 = arith.constant 0 : index
    %15 = vector.load %arg10[%c0_20, %c0_21, %c1, %c1_22, %c0_23] : memref<4x1x9x9x4xf32, #tpu.memory_space<vmem>>, vector<4x1x8x8x4xf32>
    tpu.vector_store %arg10[%c0_20, %c0_21, %c1, %c1_22, %c0_23], %10 {strides = array<i32>} : memref<4x1x9x9x4xf32, #tpu.memory_space<vmem>>, vector<4x1x8x8x4xf32>,
    %16 = vector.extract_strided_slice %10 {offsets = [0, 0, 0, 0, 0], sizes = [1, 1, 8, 8, 4], strides = [1, 1, 1, 1, 1]} : vector<4x1x8x8x4xf32> to vector<1x1x8x8x4xf32>
    %17 = vector.shape_cast %16 : vector<1x1x8x8x4xf32> to vector<1x8x8x4xf32>
    %c3 = arith.constant 3 : index
    %c0_24 = arith.constant 0 : index
    %c0_25 = arith.constant 0 : index
    %c0_26 = arith.constant 0 : index
    %c0_27 = arith.constant 0 : index
    %18 = vector.load %arg10[%c3, %c0_24, %c0_25, %c0_26, %c0_27] : memref<4x1x9x9x4xf32, #tpu.memory_space<vmem>>, vector<1x1x8x8x4xf32>
    %19 = vector.shape_cast %18 : vector<1x1x8x8x4xf32> to vector<1x8x8x4xf32>
    %20 = vector.shape_cast %19 : vector<1x8x8x4xf32> to vector<64x4xf32>
    %c2 = arith.constant 2 : index
    %c0_28 = arith.constant 0 : index
    %c0_29 = arith.constant 0 : index
    %c1_30 = arith.constant 1 : index
    %c0_31 = arith.constant 0 : index
    %21 = vector.load %arg10[%c2, %c0_28, %c0_29, %c1_30, %c0_31] : memref<4x1x9x9x4xf32, #tpu.memory_space<vmem>>, vector<1x1x8x8x4xf32>
    %22 = vector.shape_cast %21 : vector<1x1x8x8x4xf32> to vector<1x8x8x4xf32>
    %23 = vector.shape_cast %22 : vector<1x8x8x4xf32> to vector<64x4xf32>
    %c3_32 = arith.constant 3 : index
    %c0_33 = arith.constant 0 : index
    %c0_34 = arith.constant 0 : index
    %c1_35 = arith.constant 1 : index
    %c0_36 = arith.constant 0 : index
    %24 = vector.load %arg10[%c3_32, %c0_33, %c0_34, %c1_35, %c0_36] : memref<4x1x9x9x4xf32, #tpu.memory_space<vmem>>, vector<1x1x8x8x4xf32>
    %25 = vector.shape_cast %24 : vector<1x1x8x8x4xf32> to vector<1x8x8x4xf32>
    %26 = vector.shape_cast %25 : vector<1x8x8x4xf32> to vector<64x4xf32>
    %c1_37 = arith.constant 1 : index
    %c0_38 = arith.constant 0 : index
    %c1_39 = arith.constant 1 : index
    %c0_40 = arith.constant 0 : index
    %c0_41 = arith.constant 0 : index
    %27 = vector.load %arg10[%c1_37, %c0_38, %c1_39, %c0_40, %c0_41] : memref<4x1x9x9x4xf32, #tpu.memory_space<vmem>>, vector<1x1x8x8x4xf32>
    %28 = vector.shape_cast %27 : vector<1x1x8x8x4xf32> to vector<1x8x8x4xf32>
    %29 = vector.shape_cast %28 : vector<1x8x8x4xf32> to vector<64x4xf32>
    %c0_42 = arith.constant 0 : index
    %c0_43 = arith.constant 0 : index
    %c1_44 = arith.constant 1 : index
    %c1_45 = arith.constant 1 : index
    %c0_46 = arith.constant 0 : index
    %30 = vector.load %arg10[%c0_42, %c0_43, %c1_44, %c1_45, %c0_46] : memref<4x1x9x9x4xf32, #tpu.memory_space<vmem>>, vector<1x1x8x8x4xf32>
    %31 = vector.shape_cast %30 : vector<1x1x8x8x4xf32> to vector<1x8x8x4xf32>
    %32 = vector.shape_cast %31 : vector<1x8x8x4xf32> to vector<64x4xf32>
    %c1_47 = arith.constant 1 : index
    %c0_48 = arith.constant 0 : index
    %c1_49 = arith.constant 1 : index
    %c1_50 = arith.constant 1 : index
    %c0_51 = arith.constant 0 : index
    %33 = vector.load %arg10[%c1_47, %c0_48, %c1_49, %c1_50, %c0_51] : memref<4x1x9x9x4xf32, #tpu.memory_space<vmem>>, vector<1x1x8x8x4xf32>
    %34 = vector.shape_cast %33 : vector<1x1x8x8x4xf32> to vector<1x8x8x4xf32>
    %35 = vector.shape_cast %34 : vector<1x8x8x4xf32> to vector<64x4xf32>
    %c3_52 = arith.constant 3 : index
    %c0_53 = arith.constant 0 : index
    %c1_54 = arith.constant 1 : index
    %c0_55 = arith.constant 0 : index
    %c0_56 = arith.constant 0 : index
    %36 = vector.load %arg10[%c3_52, %c0_53, %c1_54, %c0_55, %c0_56] : memref<4x1x9x9x4xf32, #tpu.memory_space<vmem>>, vector<1x1x8x8x4xf32>
    %37 = vector.shape_cast %36 : vector<1x1x8x8x4xf32> to vector<1x8x8x4xf32>
    %38 = vector.shape_cast %37 : vector<1x8x8x4xf32> to vector<64x4xf32>
    %c2_57 = arith.constant 2 : index
    %c0_58 = arith.constant 0 : index
    %c1_59 = arith.constant 1 : index
    %c1_60 = arith.constant 1 : index
    %c0_61 = arith.constant 0 : index
    %39 = vector.load %arg10[%c2_57, %c0_58, %c1_59, %c1_60, %c0_61] : memref<4x1x9x9x4xf32, #tpu.memory_space<vmem>>, vector<1x1x8x8x4xf32>
    %40 = vector.shape_cast %39 : vector<1x1x8x8x4xf32> to vector<1x8x8x4xf32>
    %41 = vector.shape_cast %40 : vector<1x8x8x4xf32> to vector<64x4xf32>
    %c3_62 = arith.constant 3 : index
    %c0_63 = arith.constant 0 : index
    %c1_64 = arith.constant 1 : index
    %c1_65 = arith.constant 1 : index
    %c0_66 = arith.constant 0 : index
    %42 = vector.load %arg10[%c3_62, %c0_63, %c1_64, %c1_65, %c0_66] : memref<4x1x9x9x4xf32, #tpu.memory_space<vmem>>, vector<1x1x8x8x4xf32>
    %43 = vector.shape_cast %42 : vector<1x1x8x8x4xf32> to vector<1x8x8x4xf32>
    %44 = vector.shape_cast %43 : vector<1x8x8x4xf32> to vector<64x4xf32>
    %45 = tpu.concatenate %20, %23, %26, %29, %32, %35, %38, %41, %44 in 1 : vector<64x4xf32>, vector<64x4xf32>, vector<64x4xf32>, vector<64x4xf32>, vector<64x4xf32>, vector<64x4xf32>, vector<64x4xf32>, vector<64x4xf32>, vector<64x4xf32> -> vector<64x36xf32>
    %c0_67 = arith.constant 0 : index
    %c0_68 = arith.constant 0 : index
    %46 = vector.load %arg4[%c0_67, %c0_68] : memref<36x8xf32, #tpu.memory_space<vmem>>, vector<36x8xf32>
    %cst_69 = arith.constant dense<0.000000e+00> : vector<64x8xf32>
    %47 = tpu.matmul %45, %46, %cst_69 {dimension_numbers = #tpu.dot_dimension_numbers<[1], [0], [0], [1], [0, 0, 1, 1], [], []>} : vector<64x36xf32>, vector<36x8xf32>, vector<64x8xf32> -> vector<64x8xf32>
    %c0_70 = arith.constant 0 : index
    %c0_71 = arith.constant 0 : index
    %48 = vector.load %arg5[%c0_70, %c0_71] : memref<1x8xf32, #tpu.memory_space<vmem>>, vector<1x8xf32>
    %49 = vector.broadcast %48 : vector<1x8xf32> to vector<64x8xf32>
    %50 = arith.mulf %47, %49 : vector<64x8xf32>
    %c0_72 = arith.constant 0 : index
    %c0_73 = arith.constant 0 : index
    %51 = vector.load %arg6[%c0_72, %c0_73] : memref<1x8xf32, #tpu.memory_space<vmem>>, vector<1x8xf32>
    %52 = vector.broadcast %51 : vector<1x8xf32> to vector<64x8xf32>
    %53 = arith.addf %50, %52 : vector<64x8xf32>
    %cst_74 = arith.constant 0.000000e+00 : f32
    %54 = vector.broadcast %cst_74 : f32 to vector<64x8xf32>
    %55 = arith.maximumf %53, %54 : vector<64x8xf32>
    %56 = vector.shape_cast %17 : vector<1x8x8x4xf32> to vector<64x4xf32>
    %c0_75 = arith.constant 0 : index
    %c0_76 = arith.constant 0 : index
    %57 = vector.load %arg8[%c0_75, %c0_76] : memref<4x128xf32, #tpu.memory_space<vmem>>, vector<4x128xf32>
    %cst_77 = arith.constant dense<0.000000e+00> : vector<64x128xf32>
    %58 = tpu.matmul %56, %57, %cst_77 {dimension_numbers = #tpu.dot_dimension_numbers<[1], [0], [0], [1], [0, 0, 1, 1], [], []>} : vector<64x4xf32>, vector<4x128xf32>, vector<64x128xf32> -> vector<64x128xf32>
    %cst_78 = arith.constant 0.000000e+00 : f32
    %59 = vector.broadcast %cst_78 : f32 to vector<1x1x10x8xf32>
    %c0_79 = arith.constant 0 : index
    %c0_80 = arith.constant 0 : index
    %c0_81 = arith.constant 0 : index
    %c0_82 = arith.constant 0 : index
    %60 = vector.load %arg11[%c0_79, %c0_80, %c0_81, %c0_82] : memref<1x10x10x8xf32, #tpu.memory_space<vmem>>, vector<1x1x10x8xf32>
    tpu.vector_store %arg11[%c0_79, %c0_80, %c0_81, %c0_82], %59 {strides = array<i32>} : memref<1x10x10x8xf32, #tpu.memory_space<vmem>>, vector<1x1x10x8xf32>,
    %cst_83 = arith.constant 0.000000e+00 : f32
    %61 = vector.broadcast %cst_83 : f32 to vector<1x1x10x8xf32>
    %c0_84 = arith.constant 0 : index
    %c9 = arith.constant 9 : index
    %c0_85 = arith.constant 0 : index
    %c0_86 = arith.constant 0 : index
    %62 = vector.load %arg11[%c0_84, %c9, %c0_85, %c0_86] : memref<1x10x10x8xf32, #tpu.memory_space<vmem>>, vector<1x1x10x8xf32>
    tpu.vector_store %arg11[%c0_84, %c9, %c0_85, %c0_86], %61 {strides = array<i32>} : memref<1x10x10x8xf32, #tpu.memory_space<vmem>>, vector<1x1x10x8xf32>,
    %cst_87 = arith.constant 0.000000e+00 : f32
    %63 = vector.broadcast %cst_87 : f32 to vector<1x10x1x8xf32>
    %c0_88 = arith.constant 0 : index
    %c0_89 = arith.constant 0 : index
    %c0_90 = arith.constant 0 : index
    %c0_91 = arith.constant 0 : index
    %64 = vector.load %arg11[%c0_88, %c0_89, %c0_90, %c0_91] : memref<1x10x10x8xf32, #tpu.memory_space<vmem>>, vector<1x10x1x8xf32>
    tpu.vector_store %arg11[%c0_88, %c0_89, %c0_90, %c0_91], %63 {strides = array<i32>} : memref<1x10x10x8xf32, #tpu.memory_space<vmem>>, vector<1x10x1x8xf32>,
    %cst_92 = arith.constant 0.000000e+00 : f32
    %65 = vector.broadcast %cst_92 : f32 to vector<1x10x1x8xf32>
    %c0_93 = arith.constant 0 : index
    %c0_94 = arith.constant 0 : index
    %c9_95 = arith.constant 9 : index
    %c0_96 = arith.constant 0 : index
    %66 = vector.load %arg11[%c0_93, %c0_94, %c9_95, %c0_96] : memref<1x10x10x8xf32, #tpu.memory_space<vmem>>, vector<1x10x1x8xf32>
    tpu.vector_store %arg11[%c0_93, %c0_94, %c9_95, %c0_96], %65 {strides = array<i32>} : memref<1x10x10x8xf32, #tpu.memory_space<vmem>>, vector<1x10x1x8xf32>,
    %67 = vector.shape_cast %55 : vector<64x8xf32> to vector<1x8x8x8xf32>
    %c0_97 = arith.constant 0 : index
    %c1_98 = arith.constant 1 : index
    %c1_99 = arith.constant 1 : index
    %c0_100 = arith.constant 0 : index
    %68 = vector.load %arg11[%c0_97, %c1_98, %c1_99, %c0_100] : memref<1x10x10x8xf32, #tpu.memory_space<vmem>>, vector<1x8x8x8xf32>
    tpu.vector_store %arg11[%c0_97, %c1_98, %c1_99, %c0_100], %67 {strides = array<i32>} : memref<1x10x10x8xf32, #tpu.memory_space<vmem>>, vector<1x8x8x8xf32>,
    %c0_101 = arith.constant 0 : index
    %c0_102 = arith.constant 0 : index
    %c0_103 = arith.constant 0 : index
    %c0_104 = arith.constant 0 : index
    %69 = vector.load %arg11[%c0_101, %c0_102, %c0_103, %c0_104] : memref<1x10x10x8xf32, #tpu.memory_space<vmem>>, vector<1x8x8x8xf32>
    %70 = vector.shape_cast %69 : vector<1x8x8x8xf32> to vector<64x8xf32>
    %c0_105 = arith.constant 0 : index
    %c0_106 = arith.constant 0 : index
    %c1_107 = arith.constant 1 : index
    %c0_108 = arith.constant 0 : index
    %71 = vector.load %arg11[%c0_105, %c0_106, %c1_107, %c0_108] : memref<1x10x10x8xf32, #tpu.memory_space<vmem>>, vector<1x8x8x8xf32>
    %72 = vector.shape_cast %71 : vector<1x8x8x8xf32> to vector<64x8xf32>
    %c0_109 = arith.constant 0 : index
    %c0_110 = arith.constant 0 : index
    %c2_111 = arith.constant 2 : index
    %c0_112 = arith.constant 0 : index
    %73 = vector.load %arg11[%c0_109, %c0_110, %c2_111, %c0_112] : memref<1x10x10x8xf32, #tpu.memory_space<vmem>>, vector<1x8x8x8xf32>
    %74 = vector.shape_cast %73 : vector<1x8x8x8xf32> to vector<64x8xf32>
    %c0_113 = arith.constant 0 : index
    %c1_114 = arith.constant 1 : index
    %c0_115 = arith.constant 0 : index
    %c0_116 = arith.constant 0 : index
    %75 = vector.load %arg11[%c0_113, %c1_114, %c0_115, %c0_116] : memref<1x10x10x8xf32, #tpu.memory_space<vmem>>, vector<1x8x8x8xf32>
    %76 = vector.shape_cast %75 : vector<1x8x8x8xf32> to vector<64x8xf32>
    %c0_117 = arith.constant 0 : index
    %c1_118 = arith.constant 1 : index
    %c1_119 = arith.constant 1 : index
    %c0_120 = arith.constant 0 : index
    %77 = vector.load %arg11[%c0_117, %c1_118, %c1_119, %c0_120] : memref<1x10x10x8xf32, #tpu.memory_space<vmem>>, vector<1x8x8x8xf32>
    %78 = vector.shape_cast %77 : vector<1x8x8x8xf32> to vector<64x8xf32>
    %c0_121 = arith.constant 0 : index
    %c1_122 = arith.constant 1 : index
    %c2_123 = arith.constant 2 : index
    %c0_124 = arith.constant 0 : index
    %79 = vector.load %arg11[%c0_121, %c1_122, %c2_123, %c0_124] : memref<1x10x10x8xf32, #tpu.memory_space<vmem>>, vector<1x8x8x8xf32>
    %80 = vector.shape_cast %79 : vector<1x8x8x8xf32> to vector<64x8xf32>
    %c0_125 = arith.constant 0 : index
    %c2_126 = arith.constant 2 : index
    %c0_127 = arith.constant 0 : index
    %c0_128 = arith.constant 0 : index
    %81 = vector.load %arg11[%c0_125, %c2_126, %c0_127, %c0_128] : memref<1x10x10x8xf32, #tpu.memory_space<vmem>>, vector<1x8x8x8xf32>
    %82 = vector.shape_cast %81 : vector<1x8x8x8xf32> to vector<64x8xf32>
    %c0_129 = arith.constant 0 : index
    %c2_130 = arith.constant 2 : index
    %c1_131 = arith.constant 1 : index
    %c0_132 = arith.constant 0 : index
    %83 = vector.load %arg11[%c0_129, %c2_130, %c1_131, %c0_132] : memref<1x10x10x8xf32, #tpu.memory_space<vmem>>, vector<1x8x8x8xf32>
    %84 = vector.shape_cast %83 : vector<1x8x8x8xf32> to vector<64x8xf32>
    %c0_133 = arith.constant 0 : index
    %c2_134 = arith.constant 2 : index
    %c2_135 = arith.constant 2 : index
    %c0_136 = arith.constant 0 : index
    %85 = vector.load %arg11[%c0_133, %c2_134, %c2_135, %c0_136] : memref<1x10x10x8xf32, #tpu.memory_space<vmem>>, vector<1x8x8x8xf32>
    %86 = vector.shape_cast %85 : vector<1x8x8x8xf32> to vector<64x8xf32>
    %87 = tpu.concatenate %70, %72, %74, %76, %78, %80, %82, %84, %86 in 1 : vector<64x8xf32>, vector<64x8xf32>, vector<64x8xf32>, vector<64x8xf32>, vector<64x8xf32>, vector<64x8xf32>, vector<64x8xf32>, vector<64x8xf32>, vector<64x8xf32> -> vector<64x72xf32>
    %c0_137 = arith.constant 0 : index
    %c0_138 = arith.constant 0 : index
    %88 = vector.load %arg7[%c0_137, %c0_138] : memref<72x128xf32, #tpu.memory_space<vmem>>, vector<72x128xf32>
    %cst_139 = arith.constant dense<0.000000e+00> : vector<64x128xf32>
    %89 = tpu.matmul %87, %88, %cst_139 {dimension_numbers = #tpu.dot_dimension_numbers<[1], [0], [0], [1], [0, 0, 1, 1], [], []>} : vector<64x72xf32>, vector<72x128xf32>, vector<64x128xf32> -> vector<64x128xf32>
    %90 = arith.addf %58, %89 : vector<64x128xf32>
    %c0_140 = arith.constant 0 : index
    %c0_141 = arith.constant 0 : index
    %91 = vector.load %arg9[%c0_140, %c0_141] : memref<64x128xf32, #tpu.memory_space<vmem>>, vector<64x128xf32>
    tpu.vector_store %arg9[%c0_140, %c0_141], %90 {strides = array<i32>} : memref<64x128xf32, #tpu.memory_space<vmem>>, vector<64x128xf32>,
    return
  }
  func.func @transform_0(%arg0: i32) -> (i32, i32, i32, i32, i32) {
    %c0_i32 = arith.constant 0 : i32
    %c0_i32_0 = arith.constant 0 : i32
    %c0_i32_1 = arith.constant 0 : i32
    %c0_i32_2 = arith.constant 0 : i32
    %c0_i32_3 = arith.constant 0 : i32
    return %c0_i32, %arg0, %c0_i32_0, %c0_i32_1, %c0_i32_2 : i32, i32, i32, i32, i32
  }
  func.func @transform_1(%arg0: i32) -> (i32, i32) {
    %c0_i32 = arith.constant 0 : i32
    %c0_i32_0 = arith.constant 0 : i32
    %c0_i32_1 = arith.constant 0 : i32
    return %c0_i32, %c0_i32_0 : i32, i32
  }
  func.func @transform_2(%arg0: i32) -> (i32, i32) {
    %c0_i32 = arith.constant 0 : i32
    %c0_i32_0 = arith.constant 0 : i32
    %c0_i32_1 = arith.constant 0 : i32
    return %c0_i32, %c0_i32_0 : i32, i32
  }
  func.func @transform_3(%arg0: i32) -> (i32, i32) {
    %c0_i32 = arith.constant 0 : i32
    %c0_i32_0 = arith.constant 0 : i32
    %c0_i32_1 = arith.constant 0 : i32
    return %c0_i32, %c0_i32_0 : i32, i32
  }
  func.func @transform_4(%arg0: i32) -> (i32, i32) {
    %c0_i32 = arith.constant 0 : i32
    %c0_i32_0 = arith.constant 0 : i32
    %c0_i32_1 = arith.constant 0 : i32
    return %c0_i32, %c0_i32_0 : i32, i32
  }
  func.func @transform_5(%arg0: i32) -> (i32, i32) {
    %c0_i32 = arith.constant 0 : i32
    %c0_i32_0 = arith.constant 0 : i32
    %c0_i32_1 = arith.constant 0 : i32
    return %c0_i32, %c0_i32_0 : i32, i32
  }
  func.func @transform_6(%arg0: i32) -> (i32, i32) {
    %c0_i32 = arith.constant 0 : i32
    %c0_i32_0 = arith.constant 0 : i32
    %c0_i32_1 = arith.constant 0 : i32
    return %c0_i32, %c0_i32_0 : i32, i32
  }
  func.func @transform_7(%arg0: i32) -> (i32, i32) {
    %c0_i32 = arith.constant 0 : i32
    %c0_i32_0 = arith.constant 0 : i32
    %c0_i32_1 = arith.constant 0 : i32
    return %c0_i32, %c0_i32_0 : i32, i32
  }
  func.func @transform_8(%arg0: i32) -> (i32, i32) {
    %c0_i32 = arith.constant 0 : i32
    %c0_i32_0 = arith.constant 0 : i32
    return %arg0, %c0_i32 : i32, i32
  }
}

</mosaic_0001>

<llo_original>
// kernel: tpu_custom_call.1
$region0: #{tpu_custom_call.1}
  #allocation0 [shape = 'u32[]', space=smem, size = 0x4, offset = 0x4, fixed_abs, tag = 'smem constant byte address 0x4 - core index']
  #allocation1 [shape = 'u32[72,128]{1,0:T(1,128)}', space=vmem, size = 0x9000, scoped, tag = 'internal scratch']
  #allocation2 [shape = 'f32[4,1,9,9,4]{4,3,2,1,0:T(8,128)}', space=vmem, size = 0x48000, scoped, tag = 'scratch operand']
  #allocation3 [shape = 'f32[1,10,10,8]{3,2,1,0:T(8,128)}', space=vmem, size = 0x14000, scoped, tag = 'scratch operand']
  %s0 = inlined_call_operand.vmem [shape: f32[4,2,8,8,4], index: 0, kind: input, shape index: {}]
  %s1 = inlined_call_operand.vmem [shape: f32[1,4], index: 1, kind: input, shape index: {}]
  %s2 = inlined_call_operand.vmem [shape: f32[1,4], index: 2, kind: input, shape index: {}]
  %s3 = inlined_call_operand.vmem [shape: f32[36,8], index: 3, kind: input, shape index: {}]
  %s4 = inlined_call_operand.vmem [shape: f32[1,8], index: 4, kind: input, shape index: {}]
  %s5 = inlined_call_operand.vmem [shape: f32[1,8], index: 5, kind: input, shape index: {}]
  %s6 = inlined_call_operand.vmem [shape: f32[72,128], index: 6, kind: input, shape index: {}]
  %s7 = inlined_call_operand.vmem [shape: f32[4,128], index: 7, kind: input, shape index: {}]
  %s8 = inlined_call_operand.hbm [shape: f32[128,128], index: 8, kind: output, shape index: {}]
  %s9 = sld [smem:[#allocation0]]
  $region103: #{tpu_custom_call.1} parent=0
    _
  %s11 = ssub.s32 1, %s9
  %s12 = scalar_select 0, %s11, %s9
  $region1: #{tpu_custom_call.1} parent=0
    #allocation4 [shape = 'u8[262144]{0}', space=vmem, size = 0x40000, scoped, tag = 'input window, operand 0']
    #allocation5 [shape = 'u8[65536]{0}', space=vmem, size = 0x10000, scoped, tag = 'output window, operand 0']
    #allocation6 [shape = 's32[2]{0}', space=sflag, size = 0x8, scoped, tag = 'scoped memory for tpu_custom_call.1']
    %13 = vsyncpa [#allocation6], 0
    %s14 = scalar_lea.sflag [#allocation6], 1
    %15 = vsyncpa %s14, 0
    loop: start=0, step=1, limit=4
    $region2: #{tpu_custom_call.1} parent=1 // loop_pre_header
      _
    $region3: #{tpu_custom_call.1} parent=1 // loop_header
      %s17 = sphi 0, %s21
      %p18 = scmp.ge.s32.totalorder %s17, 4
      %s27 = sphi 0, %s29
      %s30 = sphi 0, %s27
      %s31 = sphi 0, %s30
      %s47 = sphi 0, %s31
      %s51 = sphi 0, %s51
      %s53 = sphi 0, %s51
      %s54 = sphi 0, %s53
      %s68 = sphi 0, %s54
      %s72 = sphi 0, %s72
      %s74 = sphi 0, %s72
      %s75 = sphi 0, %s74
      %s89 = sphi 0, %s75
      %s93 = sphi 0, %s93
      %s95 = sphi 0, %s93
      %s96 = sphi 0, %s95
      %s110 = sphi 0, %s96
      %s114 = sphi 0, %s114
      %s116 = sphi 0, %s114
      %s117 = sphi 0, %s116
      %s131 = sphi 0, %s117
      %s135 = sphi 0, %s135
      %s137 = sphi 0, %s135
      %s138 = sphi 0, %s137
      %s152 = sphi 0, %s138
      %s156 = sphi 0, %s156
      %s158 = sphi 0, %s156
      %s159 = sphi 0, %s158
      %s173 = sphi 0, %s159
      %s177 = sphi 0, %s177
      %s179 = sphi 0, %s177
      %s180 = sphi 0, %s179
      %s194 = sphi 0, %s180
      %s200 = sphi 0, %s202
      %s203 = sphi 0, %s200
      %s204 = sphi 0, %s203
      %s220 = sphi 0, %s204
    $region4: #{tpu_custom_call.1} parent=1 // loop_header_branch
      %20 = sbr.rel (%p18) target = $region8
    $region5: #{tpu_custom_call.1} parent=1 // loop_body
      %s22 = ssub.s32 %s17, 1
      %s23 = ssub.s32 %s17, 2
      %s24 = sadd.s32 %s17, 1
      %s25 = ssub.s32 %s17, %s24
      %p26 = scmp.eq.s32.totalorder %s25, 0
      %s28 = sadd.s32 %s27, 1
      %s29 = scalar_select %p26, %s27, %s28
      %p32 = pneg %p26
      %p33 = scmp.eq.s32.totalorder %s17, 1
      %p34 = por %p32, %p33
      %p35 = scmp.ne.s32.totalorder %s27, %s30
      %p36 = scmp.eq.s32.totalorder %s17, 0
      %p37 = por %p35, %p36
      %p38 = scmp.ne.s32.totalorder %s27, %s30
      %p39 = scmp.eq.s32.totalorder %s22, 1
      %p40 = por %p38, %p39
      %p41 = scmp.ne.s32.totalorder %s30, %s31
      %p42 = scmp.eq.s32.totalorder %s22, 0
      %p43 = por %p41, %p42
      %p44 = scmp.ne.s32.totalorder %s30, %s31
      %p45 = scmp.eq.s32.totalorder %s23, 1
      %p46 = por %p44, %p45
      %p48 = scmp.ne.s32.totalorder %s31, %s47
      %p49 = scmp.eq.s32.totalorder %s23, 0
      %p50 = por %p48, %p49
      %s52 = sadd.s32 %s51, 1
      %p55 = scmp.eq.s32.totalorder %s17, 1
      %p56 = scmp.ne.s32.totalorder %s51, %s53
      %p57 = scmp.eq.s32.totalorder %s17, 0
      %p58 = por %p56, %p57
      %p59 = scmp.ne.s32.totalorder %s51, %s53
      %p60 = scmp.eq.s32.totalorder %s22, 1
      %p61 = por %p59, %p60
      %p62 = scmp.ne.s32.totalorder %s53, %s54
      %p63 = scmp.eq.s32.totalorder %s22, 0
      %p64 = por %p62, %p63
      %p65 = scmp.ne.s32.totalorder %s53, %s54
      %p66 = scmp.eq.s32.totalorder %s23, 1
      %p67 = por %p65, %p66
      %p69 = scmp.ne.s32.totalorder %s54, %s68
      %p70 = scmp.eq.s32.totalorder %s23, 0
      %p71 = por %p69, %p70
      %s73 = sadd.s32 %s72, 1
      %p76 = scmp.eq.s32.totalorder %s17, 1
      %p77 = scmp.ne.s32.totalorder %s72, %s74
      %p78 = scmp.eq.s32.totalorder %s17, 0
      %p79 = por %p77, %p78
      %p80 = scmp.ne.s32.totalorder %s72, %s74
      %p81 = scmp.eq.s32.totalorder %s22, 1
      %p82 = por %p80, %p81
      %p83 = scmp.ne.s32.totalorder %s74, %s75
      %p84 = scmp.eq.s32.totalorder %s22, 0
      %p85 = por %p83, %p84
      %p86 = scmp.ne.s32.totalorder %s74, %s75
      %p87 = scmp.eq.s32.totalorder %s23, 1
      %p88 = por %p86, %p87
      %p90 = scmp.ne.s32.totalorder %s75, %s89
      %p91 = scmp.eq.s32.totalorder %s23, 0
      %p92 = por %p90, %p91
      %s94 = sadd.s32 %s93, 1
      %p97 = scmp.eq.s32.totalorder %s17, 1
      %p98 = scmp.ne.s32.totalorder %s93, %s95
      %p99 = scmp.eq.s32.totalorder %s17, 0
      %p100 = por %p98, %p99
      %p101 = scmp.ne.s32.totalorder %s93, %s95
      %p102 = scmp.eq.s32.totalorder %s22, 1
      %p103 = por %p101, %p102
      %p104 = scmp.ne.s32.totalorder %s95, %s96
      %p105 = scmp.eq.s32.totalorder %s22, 0
      %p106 = por %p104, %p105
      %p107 = scmp.ne.s32.totalorder %s95, %s96
      %p108 = scmp.eq.s32.totalorder %s23, 1
      %p109 = por %p107, %p108
      %p111 = scmp.ne.s32.totalorder %s96, %s110
      %p112 = scmp.eq.s32.totalorder %s23, 0
      %p113 = por %p111, %p112
      %s115 = sadd.s32 %s114, 1
      %p118 = scmp.eq.s32.totalorder %s17, 1
      %p119 = scmp.ne.s32.totalorder %s114, %s116
      %p120 = scmp.eq.s32.totalorder %s17, 0
      %p121 = por %p119, %p120
      %p122 = scmp.ne.s32.totalorder %s114, %s116
      %p123 = scmp.eq.s32.totalorder %s22, 1
      %p124 = por %p122, %p123
      %p125 = scmp.ne.s32.totalorder %s116, %s117
      %p126 = scmp.eq.s32.totalorder %s22, 0
      %p127 = por %p125, %p126
      %p128 = scmp.ne.s32.totalorder %s116, %s117
      %p129 = scmp.eq.s32.totalorder %s23, 1
      %p130 = por %p128, %p129
      %p132 = scmp.ne.s32.totalorder %s117, %s131
      %p133 = scmp.eq.s32.totalorder %s23, 0
      %p134 = por %p132, %p133
      %s136 = sadd.s32 %s135, 1
      %p139 = scmp.eq.s32.totalorder %s17, 1
      %p140 = scmp.ne.s32.totalorder %s135, %s137
      %p141 = scmp.eq.s32.totalorder %s17, 0
      %p142 = por %p140, %p141
      %p143 = scmp.ne.s32.totalorder %s135, %s137
      %p144 = scmp.eq.s32.totalorder %s22, 1
      %p145 = por %p143, %p144
      %p146 = scmp.ne.s32.totalorder %s137, %s138
      %p147 = scmp.eq.s32.totalorder %s22, 0
      %p148 = por %p146, %p147
      %p149 = scmp.ne.s32.totalorder %s137, %s138
      %p150 = scmp.eq.s32.totalorder %s23, 1
      %p151 = por %p149, %p150
      %p153 = scmp.ne.s32.totalorder %s138, %s152
      %p154 = scmp.eq.s32.totalorder %s23, 0
      %p155 = por %p153, %p154
      %s157 = sadd.s32 %s156, 1
      %p160 = scmp.eq.s32.totalorder %s17, 1
      %p161 = scmp.ne.s32.totalorder %s156, %s158
      %p162 = scmp.eq.s32.totalorder %s17, 0
      %p163 = por %p161, %p162
      %p164 = scmp.ne.s32.totalorder %s156, %s158
      %p165 = scmp.eq.s32.totalorder %s22, 1
      %p166 = por %p164, %p165
      %p167 = scmp.ne.s32.totalorder %s158, %s159
      %p168 = scmp.eq.s32.totalorder %s22, 0
      %p169 = por %p167, %p168
      %p170 = scmp.ne.s32.totalorder %s158, %s159
      %p171 = scmp.eq.s32.totalorder %s23, 1
      %p172 = por %p170, %p171
      %p174 = scmp.ne.s32.totalorder %s159, %s173
      %p175 = scmp.eq.s32.totalorder %s23, 0
      %p176 = por %p174, %p175
      %s178 = sadd.s32 %s177, 1
      %p181 = scmp.eq.s32.totalorder %s17, 1
      %p182 = scmp.ne.s32.totalorder %s177, %s179
      %p183 = scmp.eq.s32.totalorder %s17, 0
      %p184 = por %p182, %p183
      %p185 = scmp.ne.s32.totalorder %s177, %s179
      %p186 = scmp.eq.s32.totalorder %s22, 1
      %p187 = por %p185, %p186
      %p188 = scmp.ne.s32.totalorder %s179, %s180
      %p189 = scmp.eq.s32.totalorder %s22, 0
      %p190 = por %p188, %p189
      %p191 = scmp.ne.s32.totalorder %s179, %s180
      %p192 = scmp.eq.s32.totalorder %s23, 1
      %p193 = por %p191, %p192
      %p195 = scmp.ne.s32.totalorder %s180, %s194
      %p196 = scmp.eq.s32.totalorder %s23, 0
      %p197 = por %p195, %p196
      %s198 = ssub.s32 %s17, %s24
      %p199 = scmp.eq.s32.totalorder %s198, 0
      %s201 = sadd.s32 %s200, 1
      %s202 = scalar_select %p199, %s200, %s201
      %p205 = pneg %p199
      %p206 = scmp.eq.s32.totalorder %s17, 1
      %p207 = por %p205, %p206
      %p208 = scmp.ne.s32.totalorder %s200, %s203
      %p209 = scmp.eq.s32.totalorder %s17, 0
      %p210 = por %p208, %p209
      %p211 = scmp.ne.s32.totalorder %s200, %s203
      %p212 = scmp.eq.s32.totalorder %s22, 1
      %p213 = por %p211, %p212
      %p214 = scmp.ne.s32.totalorder %s203, %s204
      %p215 = scmp.eq.s32.totalorder %s22, 0
      %p216 = por %p214, %p215
      %p217 = scmp.ne.s32.totalorder %s203, %s204
      %p218 = scmp.eq.s32.totalorder %s23, 1
      %p219 = por %p217, %p218
      %p221 = scmp.ne.s32.totalorder %s204, %s220
      %p222 = scmp.eq.s32.totalorder %s23, 0
      %p223 = por %p221, %p222
      %p224 = scmp.le.s32.totalorder 1, %s17
      %p225 = scmp.lt.s32.totalorder %s17, 3
      %p226 = pnand %p224, %p225
      %p227 = pneg %p226
      // Predicated region
      $region9: #{tpu_custom_call.1} parent=5 // pred_check
        _
      $region10: #{tpu_custom_call.1} parent=5 // pred_check_branch
        %229 = sbr.rel (%p226) target = $region12
      $region11: #{tpu_custom_call.1} parent=5 // pred_region
        %s230 = ssub.s32 %s17, 1
        // Predicated region
        $region13: #{tpu_custom_call.1} parent=11 // pred_check
          %p231 = pneg %p64
        $region14: #{tpu_custom_call.1} parent=11 // pred_check_branch
          %233 = sbr.rel (%p231) target = $region16
        $region15: #{tpu_custom_call.1} parent=11 // pred_region
          _
        $region16: #{tpu_custom_call.1} parent=11 // pred_fallthru
          _
        // Predicated region
        $region17: #{tpu_custom_call.1} parent=11 // pred_check
          %p234 = pneg %p85
        $region18: #{tpu_custom_call.1} parent=11 // pred_check_branch
          %236 = sbr.rel (%p234) target = $region20
        $region19: #{tpu_custom_call.1} parent=11 // pred_region
          _
        $region20: #{tpu_custom_call.1} parent=11 // pred_fallthru
          _
        // Predicated region
        $region21: #{tpu_custom_call.1} parent=11 // pred_check
          %p237 = pneg %p106
        $region22: #{tpu_custom_call.1} parent=11 // pred_check_branch
          %239 = sbr.rel (%p237) target = $region24
        $region23: #{tpu_custom_call.1} parent=11 // pred_region
          _
        $region24: #{tpu_custom_call.1} parent=11 // pred_fallthru
          _
        // Predicated region
        $region25: #{tpu_custom_call.1} parent=11 // pred_check
          %p240 = pneg %p127
        $region26: #{tpu_custom_call.1} parent=11 // pred_check_branch
          %242 = sbr.rel (%p240) target = $region28
        $region27: #{tpu_custom_call.1} parent=11 // pred_region
          _
        $region28: #{tpu_custom_call.1} parent=11 // pred_fallthru
          _
        // Predicated region
        $region29: #{tpu_custom_call.1} parent=11 // pred_check
          %p243 = pneg %p148
        $region30: #{tpu_custom_call.1} parent=11 // pred_check_branch
          %245 = sbr.rel (%p243) target = $region32
        $region31: #{tpu_custom_call.1} parent=11 // pred_region
          _
        $region32: #{tpu_custom_call.1} parent=11 // pred_fallthru
          _
        // Predicated region
        $region33: #{tpu_custom_call.1} parent=11 // pred_check
          %p246 = pneg %p169
        $region34: #{tpu_custom_call.1} parent=11 // pred_check_branch
          %248 = sbr.rel (%p246) target = $region36
        $region35: #{tpu_custom_call.1} parent=11 // pred_region
          _
        $region36: #{tpu_custom_call.1} parent=11 // pred_fallthru
          _
        // Predicated region
        $region37: #{tpu_custom_call.1} parent=11 // pred_check
          %p249 = pneg %p190
        $region38: #{tpu_custom_call.1} parent=11 // pred_check_branch
          %251 = sbr.rel (%p249) target = $region40
        $region39: #{tpu_custom_call.1} parent=11 // pred_region
          _
        $region40: #{tpu_custom_call.1} parent=11 // pred_fallthru
          _
      $region12: #{tpu_custom_call.1} parent=5 // pred_fallthru
        _
      %p252 = scmp.lt.s32.totalorder %s17, 2
      // Predicated region
      $region41: #{tpu_custom_call.1} parent=5 // pred_check
        %p253 = pneg %p252
      $region42: #{tpu_custom_call.1} parent=5 // pred_check_branch
        %255 = sbr.rel (%p253) target = $region44
      $region43: #{tpu_custom_call.1} parent=5 // pred_region
        // Predicated region
        $region45: #{tpu_custom_call.1} parent=43 // pred_check
          %p256 = pneg %p37
        $region46: #{tpu_custom_call.1} parent=43 // pred_check_branch
          %258 = sbr.rel (%p256) target = $region48
        $region47: #{tpu_custom_call.1} parent=43 // pred_region
          %s259 = sand.u32 %s27, 1
          %s260 = sand.u32 %s27, 1
          %s261 = smul.addr %s260, 256
          %s262 = scalar_lea.vmem [#allocation4], %s261
          %s263 = smul.addr %s17, 8
          %s264 = smul.addr %s263, 8
          %s265 = scalar_lea.vmem %s0, %s264
          // Predicated region
          $region49: #{tpu_custom_call.1} parent=47 // pred_check
            _
          $region50: #{tpu_custom_call.1} parent=47 // pred_check_branch
            %267 = sbr.rel (0) target = $region52
          $region51: #{tpu_custom_call.1} parent=47 // pred_region
            // Predicated region
            $region53: #{tpu_custom_call.1} parent=51 // pred_check
              _
            $region54: #{tpu_custom_call.1} parent=51 // pred_check_branch
              %269 = sbr.rel (0) target = $region56
            $region55: #{tpu_custom_call.1} parent=51 // pred_region
              // Predicated region
              $region68: #{tpu_custom_call.1} parent=55 // pred_check
                _
              $region69: #{tpu_custom_call.1} parent=55 // pred_check_branch
                %347 = sbr.rel (0) target = $region71
              $region70: #{tpu_custom_call.1} parent=55 // pred_region
                loop: start=0, step=1, limit=1
                $region72: #{tpu_custom_call.1} parent=70 // loop_pre_header
                  _
                $region73: #{tpu_custom_call.1} parent=70 // loop_header
                  %s349 = sphi 0, %s353
                  %p350 = scmp.ge.s32.totalorder %s349, 1
                  %s354 = sphi %s265, %s265
                  %s355 = sphi %s262, %s262
                $region74: #{tpu_custom_call.1} parent=70 // loop_header_branch
                  %352 = sbr.rel (%p350) target = $region78
                $region75: #{tpu_custom_call.1} parent=70 // loop_body
                  %v356 = vld [vmem:[%s354] sm:$0xff]
                  %357 = vst [vmem:[%s355] sm:$0xff] %v356
                  %v358 = vld [vmem:[%s354 + $0x8] sm:$0xff]
                  %359 = vst [vmem:[%s355 + $0x8] sm:$0xff] %v358
                  %v360 = vld [vmem:[%s354 + $0x10] sm:$0xff]
                  %361 = vst [vmem:[%s355 + $0x10] sm:$0xff] %v360
                  %v362 = vld [vmem:[%s354 + $0x18] sm:$0xff]
                  %363 = vst [vmem:[%s355 + $0x18] sm:$0xff] %v362
                  %v364 = vld [vmem:[%s354 + $0x20] sm:$0xff]
                  %365 = vst [vmem:[%s355 + $0x20] sm:$0xff] %v364
                  %v366 = vld [vmem:[%s354 + $0x28] sm:$0xff]
                  %367 = vst [vmem:[%s355 + $0x28] sm:$0xff] %v366
                  %v368 = vld [vmem:[%s354 + $0x30] sm:$0xff]
                  %369 = vst [vmem:[%s355 + $0x30] sm:$0xff] %v368
                  %v370 = vld [vmem:[%s354 + $0x38] sm:$0xff]
                  %371 = vst [vmem:[%s355 + $0x38] sm:$0xff] %v370
                  %v372 = vld [vmem:[%s354 + $0x80] sm:$0xff]
                  %373 = vst [vmem:[%s355 + $0x40] sm:$0xff] %v372
                  %v374 = vld [vmem:[%s354 + $0x88] sm:$0xff]
                  %375 = vst [vmem:[%s355 + $0x48] sm:$0xff] %v374
                  %v376 = vld [vmem:[%s354 + $0x90] sm:$0xff]
                  %377 = vst [vmem:[%s355 + $0x50] sm:$0xff] %v376
                  %v378 = vld [vmem:[%s354 + $0x98] sm:$0xff]
                  %379 = vst [vmem:[%s355 + $0x58] sm:$0xff] %v378
                  %v380 = vld [vmem:[%s354 + $0xa0] sm:$0xff]
                  %381 = vst [vmem:[%s355 + $0x60] sm:$0xff] %v380
                  %v382 = vld [vmem:[%s354 + $0xa8] sm:$0xff]
                  %383 = vst [vmem:[%s355 + $0x68] sm:$0xff] %v382
                  %v384 = vld [vmem:[%s354 + $0xb0] sm:$0xff]
                  %385 = vst [vmem:[%s355 + $0x70] sm:$0xff] %v384
                  %v386 = vld [vmem:[%s354 + $0xb8] sm:$0xff]
                  %387 = vst [vmem:[%s355 + $0x78] sm:$0xff] %v386
                  %v388 = vld [vmem:[%s354 + $0x100] sm:$0xff]
                  %389 = vst [vmem:[%s355 + $0x80] sm:$0xff] %v388
                  %v390 = vld [vmem:[%s354 + $0x108] sm:$0xff]
                  %391 = vst [vmem:[%s355 + $0x88] sm:$0xff] %v390
                  %v392 = vld [vmem:[%s354 + $0x110] sm:$0xff]
                  %393 = vst [vmem:[%s355 + $0x90] sm:$0xff] %v392
                  %v394 = vld [vmem:[%s354 + $0x118] sm:$0xff]
                  %395 = vst [vmem:[%s355 + $0x98] sm:$0xff] %v394
                  %v396 = vld [vmem:[%s354 + $0x120] sm:$0xff]
                  %397 = vst [vmem:[%s355 + $0xa0] sm:$0xff] %v396
                  %v398 = vld [vmem:[%s354 + $0x128] sm:$0xff]
                  %399 = vst [vmem:[%s355 + $0xa8] sm:$0xff] %v398
                  %v400 = vld [vmem:[%s354 + $0x130] sm:$0xff]
                  %401 = vst [vmem:[%s355 + $0xb0] sm:$0xff] %v400
                  %v402 = vld [vmem:[%s354 + $0x138] sm:$0xff]
                  %403 = vst [vmem:[%s355 + $0xb8] sm:$0xff] %v402
                  %v404 = vld [vmem:[%s354 + $0x180] sm:$0xff]
                  %405 = vst [vmem:[%s355 + $0xc0] sm:$0xff] %v404
                  %v406 = vld [vmem:[%s354 + $0x188] sm:$0xff]
                  %407 = vst [vmem:[%s355 + $0xc8] sm:$0xff] %v406
                  %v408 = vld [vmem:[%s354 + $0x190] sm:$0xff]
                  %409 = vst [vmem:[%s355 + $0xd0] sm:$0xff] %v408
                  %v410 = vld [vmem:[%s354 + $0x198] sm:$0xff]
                  %411 = vst [vmem:[%s355 + $0xd8] sm:$0xff] %v410
                  %v412 = vld [vmem:[%s354 + $0x1a0] sm:$0xff]
                  %413 = vst [vmem:[%s355 + $0xe0] sm:$0xff] %v412
                  %v414 = vld [vmem:[%s354 + $0x1a8] sm:$0xff]
                  %415 = vst [vmem:[%s355 + $0xe8] sm:$0xff] %v414
                  %v416 = vld [vmem:[%s354 + $0x1b0] sm:$0xff]
                  %417 = vst [vmem:[%s355 + $0xf0] sm:$0xff] %v416
                  %v418 = vld [vmem:[%s354 + $0x1b8] sm:$0xff]
                  %419 = vst [vmem:[%s355 + $0xf8] sm:$0xff] %v418
                $region76: #{tpu_custom_call.1} parent=70 // loop_footer
                  %s353 = sadd.s32 1, %s349
                $region77: #{tpu_custom_call.1} parent=70 // loop_footer_branch
                  %348 = sbr.rel target = $region73
                $region78: #{tpu_custom_call.1} parent=70 // loop_exit
                  _
              $region71: #{tpu_custom_call.1} parent=55 // pred_fallthru
                _
              // Predicated region
              $region79: #{tpu_custom_call.1} parent=55 // pred_check
                _
              $region80: #{tpu_custom_call.1} parent=55 // pred_check_branch
                %421 = sbr.rel target = $region82
              $region81: #{tpu_custom_call.1} parent=55 // pred_region
                _
              $region82: #{tpu_custom_call.1} parent=55 // pred_fallthru
                _
            $region56: #{tpu_custom_call.1} parent=51 // pred_fallthru
              _
            // Predicated region
            $region57: #{tpu_custom_call.1} parent=51 // pred_check
              _
            $region58: #{tpu_custom_call.1} parent=51 // pred_check_branch
              %271 = sbr.rel target = $region60
            $region59: #{tpu_custom_call.1} parent=51 // pred_region
              %s273 = ssub.s32 256, 1
              loop: start=0, step=1, limit=1
              $region61: #{tpu_custom_call.1} parent=59 // loop_pre_header
                _
              $region62: #{tpu_custom_call.1} parent=59 // loop_header
                %s275 = sphi 0, %s279
                %p276 = scmp.ge.s32.totalorder %s275, 1
                %s280 = sphi %s265, %s265
                %s281 = sphi %s262, %s262
              $region63: #{tpu_custom_call.1} parent=59 // loop_header_branch
                %278 = sbr.rel (%p276) target = $region67
              $region64: #{tpu_custom_call.1} parent=59 // loop_body
                %v282 = vld [vmem:[%s280] sm:%s273]
                %283 = vst [vmem:[%s281] sm:%s273] %v282
                %v284 = vld [vmem:[%s280 + $0x8] sm:%s273]
                %285 = vst [vmem:[%s281 + $0x8] sm:%s273] %v284
                %v286 = vld [vmem:[%s280 + $0x10] sm:%s273]
                %287 = vst [vmem:[%s281 + $0x10] sm:%s273] %v286
                %v288 = vld [vmem:[%s280 + $0x18] sm:%s273]
                %289 = vst [vmem:[%s281 + $0x18] sm:%s273] %v288
                %v290 = vld [vmem:[%s280 + $0x20] sm:%s273]
                %291 = vst [vmem:[%s281 + $0x20] sm:%s273] %v290
                %v292 = vld [vmem:[%s280 + $0x28] sm:%s273]
                %293 = vst [vmem:[%s281 + $0x28] sm:%s273] %v292
                %v294 = vld [vmem:[%s280 + $0x30] sm:%s273]
                %295 = vst [vmem:[%s281 + $0x30] sm:%s273] %v294
                %v296 = vld [vmem:[%s280 + $0x38] sm:%s273]
                %297 = vst [vmem:[%s281 + $0x38] sm:%s273] %v296
                %v298 = vld [vmem:[%s280 + $0x80] sm:%s273]
                %299 = vst [vmem:[%s281 + $0x40] sm:%s273] %v298
                %v300 = vld [vmem:[%s280 + $0x88] sm:%s273]
                %301 = vst [vmem:[%s281 + $0x48] sm:%s273] %v300
                %v302 = vld [vmem:[%s280 + $0x90] sm:%s273]
                %303 = vst [vmem:[%s281 + $0x50] sm:%s273] %v302
                %v304 = vld [vmem:[%s280 + $0x98] sm:%s273]
                %305 = vst [vmem:[%s281 + $0x58] sm:%s273] %v304
                %v306 = vld [vmem:[%s280 + $0xa0] sm:%s273]
                %307 = vst [vmem:[%s281 + $0x60] sm:%s273] %v306
                %v308 = vld [vmem:[%s280 + $0xa8] sm:%s273]
                %309 = vst [vmem:[%s281 + $0x68] sm:%s273] %v308
                %v310 = vld [vmem:[%s280 + $0xb0] sm:%s273]
                %311 = vst [vmem:[%s281 + $0x70] sm:%s273] %v310
                %v312 = vld [vmem:[%s280 + $0xb8] sm:%s273]
                %313 = vst [vmem:[%s281 + $0x78] sm:%s273] %v312
                %v314 = vld [vmem:[%s280 + $0x100] sm:%s273]
                %315 = vst [vmem:[%s281 + $0x80] sm:%s273] %v314
                %v316 = vld [vmem:[%s280 + $0x108] sm:%s273]
                %317 = vst [vmem:[%s281 + $0x88] sm:%s273] %v316
                %v318 = vld [vmem:[%s280 + $0x110] sm:%s273]
                %319 = vst [vmem:[%s281 + $0x90] sm:%s273] %v318
                %v320 = vld [vmem:[%s280 + $0x118] sm:%s273]
                %321 = vst [vmem:[%s281 + $0x98] sm:%s273] %v320
                %v322 = vld [vmem:[%s280 + $0x120] sm:%s273]
                %323 = vst [vmem:[%s281 + $0xa0] sm:%s273] %v322
                %v324 = vld [vmem:[%s280 + $0x128] sm:%s273]
                %325 = vst [vmem:[%s281 + $0xa8] sm:%s273] %v324
                %v326 = vld [vmem:[%s280 + $0x130] sm:%s273]
                %327 = vst [vmem:[%s281 + $0xb0] sm:%s273] %v326
                %v328 = vld [vmem:[%s280 + $0x138] sm:%s273]
                %329 = vst [vmem:[%s281 + $0xb8] sm:%s273] %v328
                %v330 = vld [vmem:[%s280 + $0x180] sm:%s273]
                %331 = vst [vmem:[%s281 + $0xc0] sm:%s273] %v330
                %v332 = vld [vmem:[%s280 + $0x188] sm:%s273]
                %333 = vst [vmem:[%s281 + $0xc8] sm:%s273] %v332
                %v334 = vld [vmem:[%s280 + $0x190] sm:%s273]
                %335 = vst [vmem:[%s281 + $0xd0] sm:%s273] %v334
                %v336 = vld [vmem:[%s280 + $0x198] sm:%s273]
                %337 = vst [vmem:[%s281 + $0xd8] sm:%s273] %v336
                %v338 = vld [vmem:[%s280 + $0x1a0] sm:%s273]
                %339 = vst [vmem:[%s281 + $0xe0] sm:%s273] %v338
                %v340 = vld [vmem:[%s280 + $0x1a8] sm:%s273]
                %341 = vst [vmem:[%s281 + $0xe8] sm:%s273] %v340
                %v342 = vld [vmem:[%s280 + $0x1b0] sm:%s273]
                %343 = vst [vmem:[%s281 + $0xf0] sm:%s273] %v342
                %v344 = vld [vmem:[%s280 + $0x1b8] sm:%s273]
                %345 = vst [vmem:[%s281 + $0xf8] sm:%s273] %v344
              $region65: #{tpu_custom_call.1} parent=59 // loop_footer
                %s279 = sadd.s32 1, %s275
              $region66: #{tpu_custom_call.1} parent=59 // loop_footer_branch
                %274 = sbr.rel target = $region62
              $region67: #{tpu_custom_call.1} parent=59 // loop_exit
                _
            $region60: #{tpu_custom_call.1} parent=51 // pred_fallthru
              _
          $region52: #{tpu_custom_call.1} parent=47 // pred_fallthru
            _
          %422 = vnop
        $region48: #{tpu_custom_call.1} parent=43 // pred_fallthru
          _
      $region44: #{tpu_custom_call.1} parent=5 // pred_fallthru
        _
      %p423 = scmp.le.s32.totalorder 1, %s17
      %p424 = scmp.lt.s32.totalorder %s17, 3
      %p425 = pnand %p423, %p424
      %p426 = pneg %p425
      // Predicated region
      $region83: #{tpu_custom_call.1} parent=5 // pred_check
        _
      $region84: #{tpu_custom_call.1} parent=5 // pred_check_branch
        %428 = sbr.rel (%p425) target = $region86
      $region85: #{tpu_custom_call.1} parent=5 // pred_region
        %s429 = ssub.s32 %s17, 1
        %s430 = sand.u32 %s30, 1
        %s431 = sand.u32 %s30, 1
        %s432 = smul.addr %s431, 256
        %s433 = scalar_lea.vmem [#allocation4], %s432
        // Predicated region
        $region87: #{tpu_custom_call.1} parent=85 // pred_check
          %p434 = pneg %p43
        $region88: #{tpu_custom_call.1} parent=85 // pred_check_branch
          %436 = sbr.rel (%p434) target = $region90
        $region89: #{tpu_custom_call.1} parent=85 // pred_region
          _
        $region90: #{tpu_custom_call.1} parent=85 // pred_fallthru
          _
        %s437 = sand.u32 %s30, 1
        %s438 = sand.u32 %s30, 1
        %s439 = smul.addr %s438, 256
        %s440 = scalar_lea.vmem [#allocation4], %s439
        %p441 = pneg %p43
        %p442 = pneg %p40
        %p443 = pneg %p64
        %p444 = pneg %p61
        %p445 = pneg %p85
        %p446 = pneg %p82
        %p447 = pneg %p106
        %p448 = pneg %p103
        %p449 = pneg %p127
        %p450 = pneg %p124
        %p451 = pneg %p148
        %p452 = pneg %p145
        %p453 = pneg %p169
        %p454 = pneg %p166
        %p455 = pneg %p190
        %p456 = pneg %p187
        %p457 = pneg %p216
        %p458 = pneg %p213
        %s459 = sand.u32 %s203, 1
        %s460 = scalar_lea.sflag [#allocation6], %s459
        %s461 = sand.u32 %s203, 1
        %s462 = smul.addr %s461, 64
        %s463 = scalar_lea.vmem [#allocation5], %s462
        %s464 = smul.u32 8, %s22
        %v465 = vld [vmem:[%s433] sm:$0xff]
        %v466 = vld [vmem:[%s433 + $0x8] sm:$0xff]
        %v467 = vld [vmem:[%s433 + $0x10] sm:$0xff]
        %v468 = vld [vmem:[%s433 + $0x18] sm:$0xff]
        %v469 = vld [vmem:[%s433 + $0x20] sm:$0xff]
        %v470 = vld [vmem:[%s433 + $0x28] sm:$0xff]
        %v471 = vld [vmem:[%s433 + $0x30] sm:$0xff]
        %v472 = vld [vmem:[%s433 + $0x38] sm:$0xff]
        %v473 = vld [vmem:[%s433 + $0x40] sm:$0xff]
        %v474 = vld [vmem:[%s433 + $0x48] sm:$0xff]
        %v475 = vld [vmem:[%s433 + $0x50] sm:$0xff]
        %v476 = vld [vmem:[%s433 + $0x58] sm:$0xff]
        %v477 = vld [vmem:[%s433 + $0x60] sm:$0xff]
        %v478 = vld [vmem:[%s433 + $0x68] sm:$0xff]
        %v479 = vld [vmem:[%s433 + $0x70] sm:$0xff]
        %v480 = vld [vmem:[%s433 + $0x78] sm:$0xff]
        %v481 = vld [vmem:[%s433 + $0x80] sm:$0xff]
        %v482 = vld [vmem:[%s433 + $0x88] sm:$0xff]
        %v483 = vld [vmem:[%s433 + $0x90] sm:$0xff]
        %v484 = vld [vmem:[%s433 + $0x98] sm:$0xff]
        %v485 = vld [vmem:[%s433 + $0xa0] sm:$0xff]
        %v486 = vld [vmem:[%s433 + $0xa8] sm:$0xff]
        %v487 = vld [vmem:[%s433 + $0xb0] sm:$0xff]
        %v488 = vld [vmem:[%s433 + $0xb8] sm:$0xff]
        %v489 = vld [vmem:[%s433 + $0xc0] sm:$0xff]
        %v490 = vld [vmem:[%s433 + $0xc8] sm:$0xff]
        %v491 = vld [vmem:[%s433 + $0xd0] sm:$0xff]
        %v492 = vld [vmem:[%s433 + $0xd8] sm:$0xff]
        %v493 = vld [vmem:[%s433 + $0xe0] sm:$0xff]
        %v494 = vld [vmem:[%s433 + $0xe8] sm:$0xff]
        %v495 = vld [vmem:[%s433 + $0xf0] sm:$0xff]
        %v496 = vld [vmem:[%s433 + $0xf8] sm:$0xff]
        %v497 = vld [vmem:[%s1] sm:$0x1]
        %v499 = vperm.slane %v497, 0
        %v501 = vmul.f32 %v465, %v499
        %v502 = vmul.f32 %v466, %v499
        %v503 = vmul.f32 %v467, %v499
        %v504 = vmul.f32 %v468, %v499
        %v505 = vmul.f32 %v469, %v499
        %v506 = vmul.f32 %v470, %v499
        %v507 = vmul.f32 %v471, %v499
        %v508 = vmul.f32 %v472, %v499
        %v509 = vmul.f32 %v473, %v499
        %v510 = vmul.f32 %v474, %v499
        %v511 = vmul.f32 %v475, %v499
        %v512 = vmul.f32 %v476, %v499
        %v513 = vmul.f32 %v477, %v499
        %v514 = vmul.f32 %v478, %v499
        %v515 = vmul.f32 %v479, %v499
        %v516 = vmul.f32 %v480, %v499
        %v517 = vmul.f32 %v481, %v499
        %v518 = vmul.f32 %v482, %v499
        %v519 = vmul.f32 %v483, %v499
        %v520 = vmul.f32 %v484, %v499
        %v521 = vmul.f32 %v485, %v499
        %v522 = vmul.f32 %v486, %v499
        %v523 = vmul.f32 %v487, %v499
        %v524 = vmul.f32 %v488, %v499
        %v525 = vmul.f32 %v489, %v499
        %v526 = vmul.f32 %v490, %v499
        %v527 = vmul.f32 %v491, %v499
        %v528 = vmul.f32 %v492, %v499
        %v529 = vmul.f32 %v493, %v499
        %v530 = vmul.f32 %v494, %v499
        %v531 = vmul.f32 %v495, %v499
        %v532 = vmul.f32 %v496, %v499
        %v533 = vld [vmem:[%s2] sm:$0x1]
        %v535 = vperm.slane %v533, 0
        %v537 = vadd.f32 %v501, %v535
        %v538 = vadd.f32 %v502, %v535
        %v539 = vadd.f32 %v503, %v535
        %v540 = vadd.f32 %v504, %v535
        %v541 = vadd.f32 %v505, %v535
        %v542 = vadd.f32 %v506, %v535
        %v543 = vadd.f32 %v507, %v535
        %v544 = vadd.f32 %v508, %v535
        %v545 = vadd.f32 %v509, %v535
        %v546 = vadd.f32 %v510, %v535
        %v547 = vadd.f32 %v511, %v535
        %v548 = vadd.f32 %v512, %v535
        %v549 = vadd.f32 %v513, %v535
        %v550 = vadd.f32 %v514, %v535
        %v551 = vadd.f32 %v515, %v535
        %v552 = vadd.f32 %v516, %v535
        %v553 = vadd.f32 %v517, %v535
        %v554 = vadd.f32 %v518, %v535
        %v555 = vadd.f32 %v519, %v535
        %v556 = vadd.f32 %v520, %v535
        %v557 = vadd.f32 %v521, %v535
        %v558 = vadd.f32 %v522, %v535
        %v559 = vadd.f32 %v523, %v535
        %v560 = vadd.f32 %v524, %v535
        %v561 = vadd.f32 %v525, %v535
        %v562 = vadd.f32 %v526, %v535
        %v563 = vadd.f32 %v527, %v535
        %v564 = vadd.f32 %v528, %v535
        %v565 = vadd.f32 %v529, %v535
        %v566 = vadd.f32 %v530, %v535
        %v567 = vadd.f32 %v531, %v535
        %v568 = vadd.f32 %v532, %v535
        %v569 = vmax.f32 %v537, 0.0
        %v570 = vmax.f32 %v538, 0.0
        %v571 = vmax.f32 %v539, 0.0
        %v572 = vmax.f32 %v540, 0.0
        %v573 = vmax.f32 %v541, 0.0
        %v574 = vmax.f32 %v542, 0.0
        %v575 = vmax.f32 %v543, 0.0
        %v576 = vmax.f32 %v544, 0.0
        %v577 = vmax.f32 %v545, 0.0
        %v578 = vmax.f32 %v546, 0.0
        %v579 = vmax.f32 %v547, 0.0
        %v580 = vmax.f32 %v548, 0.0
        %v581 = vmax.f32 %v549, 0.0
        %v582 = vmax.f32 %v550, 0.0
        %v583 = vmax.f32 %v551, 0.0
        %v584 = vmax.f32 %v552, 0.0
        %v585 = vmax.f32 %v553, 0.0
        %v586 = vmax.f32 %v554, 0.0
        %v587 = vmax.f32 %v555, 0.0
        %v588 = vmax.f32 %v556, 0.0
        %v589 = vmax.f32 %v557, 0.0
        %v590 = vmax.f32 %v558, 0.0
        %v591 = vmax.f32 %v559, 0.0
        %v592 = vmax.f32 %v560, 0.0
        %v593 = vmax.f32 %v561, 0.0
        %v594 = vmax.f32 %v562, 0.0
        %v595 = vmax.f32 %v563, 0.0
        %v596 = vmax.f32 %v564, 0.0
        %v597 = vmax.f32 %v565, 0.0
        %v598 = vmax.f32 %v566, 0.0
        %v599 = vmax.f32 %v567, 0.0
        %v600 = vmax.f32 %v568, 0.0
        %vm601 = vcmask 31744
        %602 = vst.msk [vmem:[#allocation2] sm:$0xff] %vm601, 0.0
        %vm603 = vcmask 24576
        %604 = vst.msk [vmem:[#allocation2 + $0x8] sm:$0x1] %vm603, 0.0
        %605 = vst.msk [vmem:[#allocation2 + $0x90] sm:$0xff] %vm601, 0.0
        %606 = vst.msk [vmem:[#allocation2 + $0x98] sm:$0x1] %vm603, 0.0
        %607 = vst.msk [vmem:[#allocation2 + $0x120] sm:$0xff] %vm601, 0.0
        %608 = vst.msk [vmem:[#allocation2 + $0x128] sm:$0x1] %vm603, 0.0
        %609 = vst.msk [vmem:[#allocation2 + $0x1b0] sm:$0xff] %vm601, 0.0
        %610 = vst.msk [vmem:[#allocation2 + $0x1b8] sm:$0x1] %vm603, 0.0
        %611 = vst.msk [vmem:[#allocation2] sm:$0x1] %vm603, 0.0
        %612 = vst.msk [vmem:[#allocation2 + $0x10] sm:$0x1] %vm603, 0.0
        %613 = vst.msk [vmem:[#allocation2 + $0x20] sm:$0x1] %vm603, 0.0
        %614 = vst.msk [vmem:[#allocation2 + $0x30] sm:$0x1] %vm603, 0.0
        %615 = vst.msk [vmem:[#allocation2 + $0x40] sm:$0x1] %vm603, 0.0
        %616 = vst.msk [vmem:[#allocation2 + $0x50] sm:$0x1] %vm603, 0.0
        %617 = vst.msk [vmem:[#allocation2 + $0x60] sm:$0x1] %vm603, 0.0
        %618 = vst.msk [vmem:[#allocation2 + $0x70] sm:$0x1] %vm603, 0.0
        %619 = vst.msk [vmem:[#allocation2 + $0x80] sm:$0x1] %vm603, 0.0
        %620 = vst.msk [vmem:[#allocation2 + $0x90] sm:$0x1] %vm603, 0.0
        %621 = vst.msk [vmem:[#allocation2 + $0xa0] sm:$0x1] %vm603, 0.0
        %622 = vst.msk [vmem:[#allocation2 + $0xb0] sm:$0x1] %vm603, 0.0
        %623 = vst.msk [vmem:[#allocation2 + $0xc0] sm:$0x1] %vm603, 0.0
        %624 = vst.msk [vmem:[#allocation2 + $0xd0] sm:$0x1] %vm603, 0.0
        %625 = vst.msk [vmem:[#allocation2 + $0xe0] sm:$0x1] %vm603, 0.0
        %626 = vst.msk [vmem:[#allocation2 + $0xf0] sm:$0x1] %vm603, 0.0
        %627 = vst.msk [vmem:[#allocation2 + $0x100] sm:$0x1] %vm603, 0.0
        %628 = vst.msk [vmem:[#allocation2 + $0x110] sm:$0x1] %vm603, 0.0
        %629 = vst.msk [vmem:[#allocation2 + $0x120] sm:$0x1] %vm603, 0.0
        %630 = vst.msk [vmem:[#allocation2 + $0x130] sm:$0x1] %vm603, 0.0
        %631 = vst.msk [vmem:[#allocation2 + $0x140] sm:$0x1] %vm603, 0.0
        %632 = vst.msk [vmem:[#allocation2 + $0x150] sm:$0x1] %vm603, 0.0
        %633 = vst.msk [vmem:[#allocation2 + $0x160] sm:$0x1] %vm603, 0.0
        %634 = vst.msk [vmem:[#allocation2 + $0x170] sm:$0x1] %vm603, 0.0
        %635 = vst.msk [vmem:[#allocation2 + $0x180] sm:$0x1] %vm603, 0.0
        %636 = vst.msk [vmem:[#allocation2 + $0x190] sm:$0x1] %vm603, 0.0
        %637 = vst.msk [vmem:[#allocation2 + $0x1a0] sm:$0x1] %vm603, 0.0
        %638 = vst.msk [vmem:[#allocation2 + $0x1b0] sm:$0x1] %vm603, 0.0
        %639 = vst.msk [vmem:[#allocation2 + $0x1c0] sm:$0x1] %vm603, 0.0
        %640 = vst.msk [vmem:[#allocation2 + $0x1d0] sm:$0x1] %vm603, 0.0
        %641 = vst.msk [vmem:[#allocation2 + $0x1e0] sm:$0x1] %vm603, 0.0
        %642 = vst.msk [vmem:[#allocation2 + $0x1f0] sm:$0x1] %vm603, 0.0
        %643 = vst.msk [vmem:[#allocation2 + $0x200] sm:$0x1] %vm603, 0.0
        %644 = vst.msk [vmem:[#allocation2 + $0x210] sm:$0x1] %vm603, 0.0
        %645 = vst.msk [vmem:[#allocation2 + $0x220] sm:$0x1] %vm603, 0.0
        %646 = vst.msk [vmem:[#allocation2 + $0x230] sm:$0x1] %vm603, 0.0
        %s647 = scalar_lea.vmem [#allocation2], 16
        %648 = vst.msk [vmem:[%s647 + $0x1] sm:$0xff] %vm601, %v569
        %649 = vst.msk [vmem:[%s647 + $0x11] sm:$0xff] %vm601, %v570
        %650 = vst.msk [vmem:[%s647 + $0x21] sm:$0xff] %vm601, %v571
        %651 = vst.msk [vmem:[%s647 + $0x31] sm:$0xff] %vm601, %v572
        %652 = vst.msk [vmem:[%s647 + $0x41] sm:$0xff] %vm601, %v573
        %653 = vst.msk [vmem:[%s647 + $0x51] sm:$0xff] %vm601, %v574
        %654 = vst.msk [vmem:[%s647 + $0x61] sm:$0xff] %vm601, %v575
        %655 = vst.msk [vmem:[%s647 + $0x71] sm:$0xff] %vm601, %v576
        %656 = vst.msk [vmem:[%s647 + $0x91] sm:$0xff] %vm601, %v577
        %657 = vst.msk [vmem:[%s647 + $0xa1] sm:$0xff] %vm601, %v578
        %658 = vst.msk [vmem:[%s647 + $0xb1] sm:$0xff] %vm601, %v579
        %659 = vst.msk [vmem:[%s647 + $0xc1] sm:$0xff] %vm601, %v580
        %660 = vst.msk [vmem:[%s647 + $0xd1] sm:$0xff] %vm601, %v581
        %661 = vst.msk [vmem:[%s647 + $0xe1] sm:$0xff] %vm601, %v582
        %662 = vst.msk [vmem:[%s647 + $0xf1] sm:$0xff] %vm601, %v583
        %663 = vst.msk [vmem:[%s647 + $0x101] sm:$0xff] %vm601, %v584
        %664 = vst.msk [vmem:[%s647 + $0x121] sm:$0xff] %vm601, %v585
        %665 = vst.msk [vmem:[%s647 + $0x131] sm:$0xff] %vm601, %v586
        %666 = vst.msk [vmem:[%s647 + $0x141] sm:$0xff] %vm601, %v587
        %667 = vst.msk [vmem:[%s647 + $0x151] sm:$0xff] %vm601, %v588
        %668 = vst.msk [vmem:[%s647 + $0x161] sm:$0xff] %vm601, %v589
        %669 = vst.msk [vmem:[%s647 + $0x171] sm:$0xff] %vm601, %v590
        %670 = vst.msk [vmem:[%s647 + $0x181] sm:$0xff] %vm601, %v591
        %671 = vst.msk [vmem:[%s647 + $0x191] sm:$0xff] %vm601, %v592
        %672 = vst.msk [vmem:[%s647 + $0x1b1] sm:$0xff] %vm601, %v593
        %673 = vst.msk [vmem:[%s647 + $0x1c1] sm:$0xff] %vm601, %v594
        %674 = vst.msk [vmem:[%s647 + $0x1d1] sm:$0xff] %vm601, %v595
        %675 = vst.msk [vmem:[%s647 + $0x1e1] sm:$0xff] %vm601, %v596
        %676 = vst.msk [vmem:[%s647 + $0x1f1] sm:$0xff] %vm601, %v597
        %677 = vst.msk [vmem:[%s647 + $0x201] sm:$0xff] %vm601, %v598
        %678 = vst.msk [vmem:[%s647 + $0x211] sm:$0xff] %vm601, %v599
        %679 = vst.msk [vmem:[%s647 + $0x221] sm:$0xff] %vm601, %v600
        %s680 = scalar_lea.vmem [#allocation2], 432
        %v681 = vld [vmem:[%s680] sm:$0xff]
        %v682 = vld [vmem:[%s680 + $0x10] sm:$0xff]
        %v683 = vld [vmem:[%s680 + $0x20] sm:$0xff]
        %v684 = vld [vmem:[%s680 + $0x30] sm:$0xff]
        %v685 = vld [vmem:[%s680 + $0x40] sm:$0xff]
        %v686 = vld [vmem:[%s680 + $0x50] sm:$0xff]
        %v687 = vld [vmem:[%s680 + $0x60] sm:$0xff]
        %v688 = vld [vmem:[%s680 + $0x70] sm:$0xff]
        %s689 = scalar_lea.vmem [#allocation2], 288
        %v690 = vld [vmem:[%s689 + $0x1] sm:$0xff]
        %v691 = vld [vmem:[%s689 + $0x11] sm:$0xff]
        %v692 = vld [vmem:[%s689 + $0x21] sm:$0xff]
        %v693 = vld [vmem:[%s689 + $0x31] sm:$0xff]
        %v694 = vld [vmem:[%s689 + $0x41] sm:$0xff]
        %v695 = vld [vmem:[%s689 + $0x51] sm:$0xff]
        %v696 = vld [vmem:[%s689 + $0x61] sm:$0xff]
        %v697 = vld [vmem:[%s689 + $0x71] sm:$0xff]
        %v698 = vld [vmem:[%s680 + $0x1] sm:$0xff]
        %v699 = vld [vmem:[%s680 + $0x11] sm:$0xff]
        %v700 = vld [vmem:[%s680 + $0x21] sm:$0xff]
        %v701 = vld [vmem:[%s680 + $0x31] sm:$0xff]
        %v702 = vld [vmem:[%s680 + $0x41] sm:$0xff]
        %v703 = vld [vmem:[%s680 + $0x51] sm:$0xff]
        %v704 = vld [vmem:[%s680 + $0x61] sm:$0xff]
        %v705 = vld [vmem:[%s680 + $0x71] sm:$0xff]
        %s706 = scalar_lea.vmem [#allocation2], 160
        %v707 = vld [vmem:[%s706] sm:$0xff]
        %v708 = vld [vmem:[%s706 + $0x10] sm:$0xff]
        %v709 = vld [vmem:[%s706 + $0x20] sm:$0xff]
        %v710 = vld [vmem:[%s706 + $0x30] sm:$0xff]
        %v711 = vld [vmem:[%s706 + $0x40] sm:$0xff]
        %v712 = vld [vmem:[%s706 + $0x50] sm:$0xff]
        %v713 = vld [vmem:[%s706 + $0x60] sm:$0xff]
        %v714 = vld [vmem:[%s706 + $0x70] sm:$0xff]
        %v715 = vld [vmem:[%s647 + $0x1] sm:$0xff]
        %v716 = vld [vmem:[%s647 + $0x11] sm:$0xff]
        %v717 = vld [vmem:[%s647 + $0x21] sm:$0xff]
        %v718 = vld [vmem:[%s647 + $0x31] sm:$0xff]
        %v719 = vld [vmem:[%s647 + $0x41] sm:$0xff]
        %v720 = vld [vmem:[%s647 + $0x51] sm:$0xff]
        %v721 = vld [vmem:[%s647 + $0x61] sm:$0xff]
        %v722 = vld [vmem:[%s647 + $0x71] sm:$0xff]
        %v723 = vld [vmem:[%s706 + $0x1] sm:$0xff]
        %v724 = vld [vmem:[%s706 + $0x11] sm:$0xff]
        %v725 = vld [vmem:[%s706 + $0x21] sm:$0xff]
        %v726 = vld [vmem:[%s706 + $0x31] sm:$0xff]
        %v727 = vld [vmem:[%s706 + $0x41] sm:$0xff]
        %v728 = vld [vmem:[%s706 + $0x51] sm:$0xff]
        %v729 = vld [vmem:[%s706 + $0x61] sm:$0xff]
        %v730 = vld [vmem:[%s706 + $0x71] sm:$0xff]
        %s731 = scalar_lea.vmem [#allocation2], 448
        %v732 = vld [vmem:[%s731] sm:$0xff]
        %v733 = vld [vmem:[%s731 + $0x10] sm:$0xff]
        %v734 = vld [vmem:[%s731 + $0x20] sm:$0xff]
        %v735 = vld [vmem:[%s731 + $0x30] sm:$0xff]
        %v736 = vld [vmem:[%s731 + $0x40] sm:$0xff]
        %v737 = vld [vmem:[%s731 + $0x50] sm:$0xff]
        %v738 = vld [vmem:[%s731 + $0x60] sm:$0xff]
        %v739 = vld [vmem:[%s731 + $0x70] sm:$0xff]
        %s740 = scalar_lea.vmem [#allocation2], 304
        %v741 = vld [vmem:[%s740 + $0x1] sm:$0xff]
        %v742 = vld [vmem:[%s740 + $0x11] sm:$0xff]
        %v743 = vld [vmem:[%s740 + $0x21] sm:$0xff]
        %v744 = vld [vmem:[%s740 + $0x31] sm:$0xff]
        %v745 = vld [vmem:[%s740 + $0x41] sm:$0xff]
        %v746 = vld [vmem:[%s740 + $0x51] sm:$0xff]
        %v747 = vld [vmem:[%s740 + $0x61] sm:$0xff]
        %v748 = vld [vmem:[%s740 + $0x71] sm:$0xff]
        %v749 = vld [vmem:[%s731 + $0x1] sm:$0xff]
        %v750 = vld [vmem:[%s731 + $0x11] sm:$0xff]
        %v751 = vld [vmem:[%s731 + $0x21] sm:$0xff]
        %v752 = vld [vmem:[%s731 + $0x31] sm:$0xff]
        %v753 = vld [vmem:[%s731 + $0x41] sm:$0xff]
        %v754 = vld [vmem:[%s731 + $0x51] sm:$0xff]
        %v755 = vld [vmem:[%s731 + $0x61] sm:$0xff]
        %v756 = vld [vmem:[%s731 + $0x71] sm:$0xff]
        %765 = vrot.lane.b32.xlu0 %v690, 4
        %v766 = vpop.permute.xlu0 %765
        %767 = vrot.lane.b32.xlu0 %v691, 4
        %v768 = vpop.permute.xlu0 %767
        %769 = vrot.lane.b32.xlu0 %v692, 4
        %v770 = vpop.permute.xlu0 %769
        %771 = vrot.lane.b32.xlu0 %v693, 4
        %v772 = vpop.permute.xlu0 %771
        %773 = vrot.lane.b32.xlu0 %v694, 4
        %v774 = vpop.permute.xlu0 %773
        %775 = vrot.lane.b32.xlu0 %v695, 4
        %v776 = vpop.permute.xlu0 %775
        %777 = vrot.lane.b32.xlu0 %v696, 4
        %v778 = vpop.permute.xlu0 %777
        %779 = vrot.lane.b32.xlu0 %v697, 4
        %v780 = vpop.permute.xlu0 %779
        %797 = vrot.lane.b32.xlu0 %v698, 8
        %v798 = vpop.permute.xlu0 %797
        %799 = vrot.lane.b32.xlu0 %v699, 8
        %v800 = vpop.permute.xlu0 %799
        %801 = vrot.lane.b32.xlu0 %v700, 8
        %v802 = vpop.permute.xlu0 %801
        %803 = vrot.lane.b32.xlu0 %v701, 8
        %v804 = vpop.permute.xlu0 %803
        %805 = vrot.lane.b32.xlu0 %v702, 8
        %v806 = vpop.permute.xlu0 %805
        %807 = vrot.lane.b32.xlu0 %v703, 8
        %v808 = vpop.permute.xlu0 %807
        %809 = vrot.lane.b32.xlu0 %v704, 8
        %v810 = vpop.permute.xlu0 %809
        %811 = vrot.lane.b32.xlu0 %v705, 8
        %v812 = vpop.permute.xlu0 %811
        %829 = vrot.lane.b32.xlu0 %v707, 12
        %v830 = vpop.permute.xlu0 %829
        %831 = vrot.lane.b32.xlu0 %v708, 12
        %v832 = vpop.permute.xlu0 %831
        %833 = vrot.lane.b32.xlu0 %v709, 12
        %v834 = vpop.permute.xlu0 %833
        %835 = vrot.lane.b32.xlu0 %v710, 12
        %v836 = vpop.permute.xlu0 %835
        %837 = vrot.lane.b32.xlu0 %v711, 12
        %v838 = vpop.permute.xlu0 %837
        %839 = vrot.lane.b32.xlu0 %v712, 12
        %v840 = vpop.permute.xlu0 %839
        %841 = vrot.lane.b32.xlu0 %v713, 12
        %v842 = vpop.permute.xlu0 %841
        %843 = vrot.lane.b32.xlu0 %v714, 12
        %v844 = vpop.permute.xlu0 %843
        %861 = vrot.lane.b32.xlu0 %v715, 16
        %v862 = vpop.permute.xlu0 %861
        %863 = vrot.lane.b32.xlu0 %v716, 16
        %v864 = vpop.permute.xlu0 %863
        %865 = vrot.lane.b32.xlu0 %v717, 16
        %v866 = vpop.permute.xlu0 %865
        %867 = vrot.lane.b32.xlu0 %v718, 16
        %v868 = vpop.permute.xlu0 %867
        %869 = vrot.lane.b32.xlu0 %v719, 16
        %v870 = vpop.permute.xlu0 %869
        %871 = vrot.lane.b32.xlu0 %v720, 16
        %v872 = vpop.permute.xlu0 %871
        %873 = vrot.lane.b32.xlu0 %v721, 16
        %v874 = vpop.permute.xlu0 %873
        %875 = vrot.lane.b32.xlu0 %v722, 16
        %v876 = vpop.permute.xlu0 %875
        %893 = vrot.lane.b32.xlu0 %v723, 20
        %v894 = vpop.permute.xlu0 %893
        %895 = vrot.lane.b32.xlu0 %v724, 20
        %v896 = vpop.permute.xlu0 %895
        %897 = vrot.lane.b32.xlu0 %v725, 20
        %v898 = vpop.permute.xlu0 %897
        %899 = vrot.lane.b32.xlu0 %v726, 20
        %v900 = vpop.permute.xlu0 %899
        %901 = vrot.lane.b32.xlu0 %v727, 20
        %v902 = vpop.permute.xlu0 %901
        %903 = vrot.lane.b32.xlu0 %v728, 20
        %v904 = vpop.permute.xlu0 %903
        %905 = vrot.lane.b32.xlu0 %v729, 20
        %v906 = vpop.permute.xlu0 %905
        %907 = vrot.lane.b32.xlu0 %v730, 20
        %v908 = vpop.permute.xlu0 %907
        %925 = vrot.lane.b32.xlu0 %v732, 24
        %v926 = vpop.permute.xlu0 %925
        %927 = vrot.lane.b32.xlu0 %v733, 24
        %v928 = vpop.permute.xlu0 %927
        %929 = vrot.lane.b32.xlu0 %v734, 24
        %v930 = vpop.permute.xlu0 %929
        %931 = vrot.lane.b32.xlu0 %v735, 24
        %v932 = vpop.permute.xlu0 %931
        %933 = vrot.lane.b32.xlu0 %v736, 24
        %v934 = vpop.permute.xlu0 %933
        %935 = vrot.lane.b32.xlu0 %v737, 24
        %v936 = vpop.permute.xlu0 %935
        %937 = vrot.lane.b32.xlu0 %v738, 24
        %v938 = vpop.permute.xlu0 %937
        %939 = vrot.lane.b32.xlu0 %v739, 24
        %v940 = vpop.permute.xlu0 %939
        %957 = vrot.lane.b32.xlu0 %v741, 28
        %v958 = vpop.permute.xlu0 %957
        %959 = vrot.lane.b32.xlu0 %v742, 28
        %v960 = vpop.permute.xlu0 %959
        %961 = vrot.lane.b32.xlu0 %v743, 28
        %v962 = vpop.permute.xlu0 %961
        %963 = vrot.lane.b32.xlu0 %v744, 28
        %v964 = vpop.permute.xlu0 %963
        %965 = vrot.lane.b32.xlu0 %v745, 28
        %v966 = vpop.permute.xlu0 %965
        %967 = vrot.lane.b32.xlu0 %v746, 28
        %v968 = vpop.permute.xlu0 %967
        %969 = vrot.lane.b32.xlu0 %v747, 28
        %v970 = vpop.permute.xlu0 %969
        %971 = vrot.lane.b32.xlu0 %v748, 28
        %v972 = vpop.permute.xlu0 %971
        %989 = vrot.lane.b32.xlu0 %v749, 32
        %v990 = vpop.permute.xlu0 %989
        %991 = vrot.lane.b32.xlu0 %v750, 32
        %v992 = vpop.permute.xlu0 %991
        %993 = vrot.lane.b32.xlu0 %v751, 32
        %v994 = vpop.permute.xlu0 %993
        %995 = vrot.lane.b32.xlu0 %v752, 32
        %v996 = vpop.permute.xlu0 %995
        %997 = vrot.lane.b32.xlu0 %v753, 32
        %v998 = vpop.permute.xlu0 %997
        %999 = vrot.lane.b32.xlu0 %v754, 32
        %v1000 = vpop.permute.xlu0 %999
        %1001 = vrot.lane.b32.xlu0 %v755, 32
        %v1002 = vpop.permute.xlu0 %1001
        %1003 = vrot.lane.b32.xlu0 %v756, 32
        %v1004 = vpop.permute.xlu0 %1003
        %v1013 = vsel %vm601, %v681, %v766
        %v1014 = vsel %vm601, %v682, %v768
        %v1015 = vsel %vm601, %v683, %v770
        %v1016 = vsel %vm601, %v684, %v772
        %v1017 = vsel %vm601, %v685, %v774
        %v1018 = vsel %vm601, %v686, %v776
        %v1019 = vsel %vm601, %v687, %v778
        %v1020 = vsel %vm601, %v688, %v780
        %vm1021 = vcmask 64512
        %v1022 = vsel %vm1021, %v1013, %v798
        %v1023 = vsel %vm1021, %v1014, %v800
        %v1024 = vsel %vm1021, %v1015, %v802
        %v1025 = vsel %vm1021, %v1016, %v804
        %v1026 = vsel %vm1021, %v1017, %v806
        %v1027 = vsel %vm1021, %v1018, %v808
        %v1028 = vsel %vm1021, %v1019, %v810
        %v1029 = vsel %vm1021, %v1020, %v812
        %vm1030 = vcmask 97280
        %v1031 = vsel %vm1030, %v1022, %v830
        %v1032 = vsel %vm1030, %v1023, %v832
        %v1033 = vsel %vm1030, %v1024, %v834
        %v1034 = vsel %vm1030, %v1025, %v836
        %v1035 = vsel %vm1030, %v1026, %v838
        %v1036 = vsel %vm1030, %v1027, %v840
        %v1037 = vsel %vm1030, %v1028, %v842
        %v1038 = vsel %vm1030, %v1029, %v844
        %vm1039 = vcmask 130048
        %v1040 = vsel %vm1039, %v1031, %v862
        %v1041 = vsel %vm1039, %v1032, %v864
        %v1042 = vsel %vm1039, %v1033, %v866
        %v1043 = vsel %vm1039, %v1034, %v868
        %v1044 = vsel %vm1039, %v1035, %v870
        %v1045 = vsel %vm1039, %v1036, %v872
        %v1046 = vsel %vm1039, %v1037, %v874
        %v1047 = vsel %vm1039, %v1038, %v876
        %vm1048 = vcmask 162816
        %v1049 = vsel %vm1048, %v1040, %v894
        %v1050 = vsel %vm1048, %v1041, %v896
        %v1051 = vsel %vm1048, %v1042, %v898
        %v1052 = vsel %vm1048, %v1043, %v900
        %v1053 = vsel %vm1048, %v1044, %v902
        %v1054 = vsel %vm1048, %v1045, %v904
        %v1055 = vsel %vm1048, %v1046, %v906
        %v1056 = vsel %vm1048, %v1047, %v908
        %vm1057 = vcmask 195584
        %v1058 = vsel %vm1057, %v1049, %v926
        %v1059 = vsel %vm1057, %v1050, %v928
        %v1060 = vsel %vm1057, %v1051, %v930
        %v1061 = vsel %vm1057, %v1052, %v932
        %v1062 = vsel %vm1057, %v1053, %v934
        %v1063 = vsel %vm1057, %v1054, %v936
        %v1064 = vsel %vm1057, %v1055, %v938
        %v1065 = vsel %vm1057, %v1056, %v940
        %vm1066 = vcmask 228352
        %v1067 = vsel %vm1066, %v1058, %v958
        %v1068 = vsel %vm1066, %v1059, %v960
        %v1069 = vsel %vm1066, %v1060, %v962
        %v1070 = vsel %vm1066, %v1061, %v964
        %v1071 = vsel %vm1066, %v1062, %v966
        %v1072 = vsel %vm1066, %v1063, %v968
        %v1073 = vsel %vm1066, %v1064, %v970
        %v1074 = vsel %vm1066, %v1065, %v972
        %vm1075 = vcmask 261120
        %v1076 = vsel %vm1075, %v1067, %v990
        %v1077 = vsel %vm1075, %v1068, %v992
        %v1078 = vsel %vm1075, %v1069, %v994
        %v1079 = vsel %vm1075, %v1070, %v996
        %v1080 = vsel %vm1075, %v1071, %v998
        %v1081 = vsel %vm1075, %v1072, %v1000
        %v1082 = vsel %vm1075, %v1073, %v1002
        %v1083 = vsel %vm1075, %v1074, %v1004
        %v1084 = vld [vmem:[%s3] sm:$0xff]
        %v1085 = vld [vmem:[%s3 + $0x8] sm:$0xff]
        %v1086 = vld [vmem:[%s3 + $0x10] sm:$0xff]
        %v1087 = vld [vmem:[%s3 + $0x18] sm:$0xff]
        %v1088 = vld [vmem:[%s3 + $0x20] sm:$0xf]
        %vm1089 = vcmask 293888
        %v1091 = vsel %vm1089, %v1076, 0
        %v1094 = vsel %vm1089, %v1077, 0
        %v1097 = vsel %vm1089, %v1078, 0
        %v1100 = vsel %vm1089, %v1079, 0
        %v1103 = vsel %vm1089, %v1080, 0
        %v1106 = vsel %vm1089, %v1081, 0
        %v1109 = vsel %vm1089, %v1082, 0
        %v1112 = vsel %vm1089, %v1083, 0
        %vm1114 = vcmask 1043456
        %v1116 = vsel %vm1114, %v1088, 0
        %1118 = vmatpush.msra.mxu0 0.0
        %1119 = vmatpush.msra.mxu0 0.0
        %1120 = vmatpush.msra.mxu0 0.0
        %1121 = vmatpush.msra.mxu0 0.0
        %1122 = vmatpush.msra.mxu0 0.0
        %1123 = vmatpush.msra.mxu0 0.0
        %1124 = vmatpush.msra.mxu0 0.0
        %1125 = vmatpush.msra.mxu0 0.0
        %1126 = vmatpush.msra.mxu0 0.0
        %1127 = vmatpush.msra.mxu0 0.0
        %1128 = vmatpush.msra.mxu0 0.0
        %1129 = vmatpush.msra.mxu0 %v1116
        %1130 = vmatpush.msra.mxu0 %v1087
        %1131 = vmatpush.msra.mxu0 %v1086
        %1132 = vmatpush.msra.mxu0 %v1085
        %1133 = vmatpush.msra.mxu0 %v1084
        %1134 = vmatmul.f32.gmra.mxu0 %v1091
        %v1135 = vpop.f32.mrf.mxu0
        %v1136 = vadd.f32 0.0, %v1135
        %1137 = vmatmul.f32.gmra.mxu0 %v1094
        %v1138 = vpop.f32.mrf.mxu0
        %v1139 = vadd.f32 0.0, %v1138
        %1140 = vmatmul.f32.gmra.mxu0 %v1097
        %v1141 = vpop.f32.mrf.mxu0
        %v1142 = vadd.f32 0.0, %v1141
        %1143 = vmatmul.f32.gmra.mxu0 %v1100
        %v1144 = vpop.f32.mrf.mxu0
        %v1145 = vadd.f32 0.0, %v1144
        %1146 = vmatmul.f32.gmra.mxu0 %v1103
        %v1147 = vpop.f32.mrf.mxu0
        %v1148 = vadd.f32 0.0, %v1147
        %1149 = vmatmul.f32.gmra.mxu0 %v1106
        %v1150 = vpop.f32.mrf.mxu0
        %v1151 = vadd.f32 0.0, %v1150
        %1152 = vmatmul.f32.gmra.mxu0 %v1109
        %v1153 = vpop.f32.mrf.mxu0
        %v1154 = vadd.f32 0.0, %v1153
        %1155 = vmatmul.f32.gmra.mxu0 %v1112
        %v1156 = vpop.f32.mrf.mxu0
        %v1157 = vadd.f32 0.0, %v1156
        %1158 = vdwg.mxu0
        %v1159 = vld [vmem:[%s4] sm:$0x1]
        %v1161 = vperm.slane %v1159, 0
        %v1163 = vmul.f32 %v1136, %v1161
        %v1164 = vmul.f32 %v1139, %v1161
        %v1165 = vmul.f32 %v1142, %v1161
        %v1166 = vmul.f32 %v1145, %v1161
        %v1167 = vmul.f32 %v1148, %v1161
        %v1168 = vmul.f32 %v1151, %v1161
        %v1169 = vmul.f32 %v1154, %v1161
        %v1170 = vmul.f32 %v1157, %v1161
        %v1171 = vld [vmem:[%s5] sm:$0x1]
        %v1173 = vperm.slane %v1171, 0
        %v1175 = vadd.f32 %v1163, %v1173
        %v1176 = vadd.f32 %v1164, %v1173
        %v1177 = vadd.f32 %v1165, %v1173
        %v1178 = vadd.f32 %v1166, %v1173
        %v1179 = vadd.f32 %v1167, %v1173
        %v1180 = vadd.f32 %v1168, %v1173
        %v1181 = vadd.f32 %v1169, %v1173
        %v1182 = vadd.f32 %v1170, %v1173
        %v1183 = vmax.f32 %v1175, 0.0
        %v1184 = vmax.f32 %v1176, 0.0
        %v1185 = vmax.f32 %v1177, 0.0
        %v1186 = vmax.f32 %v1178, 0.0
        %v1187 = vmax.f32 %v1179, 0.0
        %v1188 = vmax.f32 %v1180, 0.0
        %v1189 = vmax.f32 %v1181, 0.0
        %v1190 = vmax.f32 %v1182, 0.0
        %v1191 = vld [vmem:[%s7] sm:$0xf]
        %1192 = vst.msk [vmem:[#allocation3] sm:$0xff] %vm1021, 0.0
        %vm1193 = vcmask 58368
        %1194 = vst.msk [vmem:[#allocation3 + $0x8] sm:$0x3] %vm1193, 0.0
        %s1195 = scalar_lea.vmem [#allocation3], 144
        %1196 = vst.msk [vmem:[%s1195] sm:$0xff] %vm1021, 0.0
        %1197 = vst.msk [vmem:[%s1195 + $0x8] sm:$0x3] %vm1193, 0.0
        %vm1198 = vcmask 57344
        %1199 = vst.msk [vmem:[#allocation3] sm:$0x1] %vm1198, 0.0
        %1200 = vst.msk [vmem:[#allocation3 + $0x10] sm:$0x1] %vm1198, 0.0
        %1201 = vst.msk [vmem:[#allocation3 + $0x20] sm:$0x1] %vm1198, 0.0
        %1202 = vst.msk [vmem:[#allocation3 + $0x30] sm:$0x1] %vm1198, 0.0
        %1203 = vst.msk [vmem:[#allocation3 + $0x40] sm:$0x1] %vm1198, 0.0
        %1204 = vst.msk [vmem:[#allocation3 + $0x50] sm:$0x1] %vm1198, 0.0
        %1205 = vst.msk [vmem:[#allocation3 + $0x60] sm:$0x1] %vm1198, 0.0
        %1206 = vst.msk [vmem:[#allocation3 + $0x70] sm:$0x1] %vm1198, 0.0
        %1207 = vst.msk [vmem:[#allocation3 + $0x80] sm:$0x1] %vm1198, 0.0
        %1208 = vst.msk [vmem:[#allocation3 + $0x90] sm:$0x1] %vm1198, 0.0
        %1209 = vst.msk [vmem:[#allocation3 + $0x9] sm:$0x1] %vm1198, 0.0
        %1210 = vst.msk [vmem:[#allocation3 + $0x19] sm:$0x1] %vm1198, 0.0
        %1211 = vst.msk [vmem:[#allocation3 + $0x29] sm:$0x1] %vm1198, 0.0
        %1212 = vst.msk [vmem:[#allocation3 + $0x39] sm:$0x1] %vm1198, 0.0
        %1213 = vst.msk [vmem:[#allocation3 + $0x49] sm:$0x1] %vm1198, 0.0
        %1214 = vst.msk [vmem:[#allocation3 + $0x59] sm:$0x1] %vm1198, 0.0
        %1215 = vst.msk [vmem:[#allocation3 + $0x69] sm:$0x1] %vm1198, 0.0
        %1216 = vst.msk [vmem:[#allocation3 + $0x79] sm:$0x1] %vm1198, 0.0
        %1217 = vst.msk [vmem:[#allocation3 + $0x89] sm:$0x1] %vm1198, 0.0
        %1218 = vst.msk [vmem:[#allocation3 + $0x99] sm:$0x1] %vm1198, 0.0
        %s1219 = scalar_lea.vmem [#allocation3], 16
        %1220 = vst.msk [vmem:[%s1219 + $0x1] sm:$0xff] %vm1021, %v1183
        %1221 = vst.msk [vmem:[%s1219 + $0x11] sm:$0xff] %vm1021, %v1184
        %1222 = vst.msk [vmem:[%s1219 + $0x21] sm:$0xff] %vm1021, %v1185
        %1223 = vst.msk [vmem:[%s1219 + $0x31] sm:$0xff] %vm1021, %v1186
        %1224 = vst.msk [vmem:[%s1219 + $0x41] sm:$0xff] %vm1021, %v1187
        %1225 = vst.msk [vmem:[%s1219 + $0x51] sm:$0xff] %vm1021, %v1188
        %1226 = vst.msk [vmem:[%s1219 + $0x61] sm:$0xff] %vm1021, %v1189
        %1227 = vst.msk [vmem:[%s1219 + $0x71] sm:$0xff] %vm1021, %v1190
        %v1228 = vld [vmem:[#allocation3] sm:$0xff]
        %v1229 = vld [vmem:[#allocation3 + $0x10] sm:$0xff]
        %v1230 = vld [vmem:[#allocation3 + $0x20] sm:$0xff]
        %v1231 = vld [vmem:[#allocation3 + $0x30] sm:$0xff]
        %v1232 = vld [vmem:[#allocation3 + $0x40] sm:$0xff]
        %v1233 = vld [vmem:[#allocation3 + $0x50] sm:$0xff]
        %v1234 = vld [vmem:[#allocation3 + $0x60] sm:$0xff]
        %v1235 = vld [vmem:[#allocation3 + $0x70] sm:$0xff]
        %v1236 = vld [vmem:[#allocation3 + $0x1] sm:$0xff]
        %v1237 = vld [vmem:[#allocation3 + $0x11] sm:$0xff]
        %v1238 = vld [vmem:[#allocation3 + $0x21] sm:$0xff]
        %v1239 = vld [vmem:[#allocation3 + $0x31] sm:$0xff]
        %v1240 = vld [vmem:[#allocation3 + $0x41] sm:$0xff]
        %v1241 = vld [vmem:[#allocation3 + $0x51] sm:$0xff]
        %v1242 = vld [vmem:[#allocation3 + $0x61] sm:$0xff]
        %v1243 = vld [vmem:[#allocation3 + $0x71] sm:$0xff]
        %v1244 = vld [vmem:[#allocation3 + $0x2] sm:$0xff]
        %v1245 = vld [vmem:[#allocation3 + $0x12] sm:$0xff]
        %v1246 = vld [vmem:[#allocation3 + $0x22] sm:$0xff]
        %v1247 = vld [vmem:[#allocation3 + $0x32] sm:$0xff]
        %v1248 = vld [vmem:[#allocation3 + $0x42] sm:$0xff]
        %v1249 = vld [vmem:[#allocation3 + $0x52] sm:$0xff]
        %v1250 = vld [vmem:[#allocation3 + $0x62] sm:$0xff]
        %v1251 = vld [vmem:[#allocation3 + $0x72] sm:$0xff]
        %v1252 = vld [vmem:[%s1219] sm:$0xff]
        %v1253 = vld [vmem:[%s1219 + $0x10] sm:$0xff]
        %v1254 = vld [vmem:[%s1219 + $0x20] sm:$0xff]
        %v1255 = vld [vmem:[%s1219 + $0x30] sm:$0xff]
        %v1256 = vld [vmem:[%s1219 + $0x40] sm:$0xff]
        %v1257 = vld [vmem:[%s1219 + $0x50] sm:$0xff]
        %v1258 = vld [vmem:[%s1219 + $0x60] sm:$0xff]
        %v1259 = vld [vmem:[%s1219 + $0x70] sm:$0xff]
        %v1260 = vld [vmem:[%s1219 + $0x1] sm:$0xff]
        %v1261 = vld [vmem:[%s1219 + $0x11] sm:$0xff]
        %v1262 = vld [vmem:[%s1219 + $0x21] sm:$0xff]
        %v1263 = vld [vmem:[%s1219 + $0x31] sm:$0xff]
        %v1264 = vld [vmem:[%s1219 + $0x41] sm:$0xff]
        %v1265 = vld [vmem:[%s1219 + $0x51] sm:$0xff]
        %v1266 = vld [vmem:[%s1219 + $0x61] sm:$0xff]
        %v1267 = vld [vmem:[%s1219 + $0x71] sm:$0xff]
        %v1268 = vld [vmem:[%s1219 + $0x2] sm:$0xff]
        %v1269 = vld [vmem:[%s1219 + $0x12] sm:$0xff]
        %v1270 = vld [vmem:[%s1219 + $0x22] sm:$0xff]
        %v1271 = vld [vmem:[%s1219 + $0x32] sm:$0xff]
        %v1272 = vld [vmem:[%s1219 + $0x42] sm:$0xff]
        %v1273 = vld [vmem:[%s1219 + $0x52] sm:$0xff]
        %v1274 = vld [vmem:[%s1219 + $0x62] sm:$0xff]
        %v1275 = vld [vmem:[%s1219 + $0x72] sm:$0xff]
        %s1276 = scalar_lea.vmem [#allocation3], 32
        %v1277 = vld [vmem:[%s1276] sm:$0xff]
        %v1278 = vld [vmem:[%s1276 + $0x10] sm:$0xff]
        %v1279 = vld [vmem:[%s1276 + $0x20] sm:$0xff]
        %v1280 = vld [vmem:[%s1276 + $0x30] sm:$0xff]
        %v1281 = vld [vmem:[%s1276 + $0x40] sm:$0xff]
        %v1282 = vld [vmem:[%s1276 + $0x50] sm:$0xff]
        %v1283 = vld [vmem:[%s1276 + $0x60] sm:$0xff]
        %v1284 = vld [vmem:[%s1276 + $0x70] sm:$0xff]
        %v1285 = vld [vmem:[%s1276 + $0x1] sm:$0xff]
        %v1286 = vld [vmem:[%s1276 + $0x11] sm:$0xff]
        %v1287 = vld [vmem:[%s1276 + $0x21] sm:$0xff]
        %v1288 = vld [vmem:[%s1276 + $0x31] sm:$0xff]
        %v1289 = vld [vmem:[%s1276 + $0x41] sm:$0xff]
        %v1290 = vld [vmem:[%s1276 + $0x51] sm:$0xff]
        %v1291 = vld [vmem:[%s1276 + $0x61] sm:$0xff]
        %v1292 = vld [vmem:[%s1276 + $0x71] sm:$0xff]
        %v1293 = vld [vmem:[%s1276 + $0x2] sm:$0xff]
        %v1294 = vld [vmem:[%s1276 + $0x12] sm:$0xff]
        %v1295 = vld [vmem:[%s1276 + $0x22] sm:$0xff]
        %v1296 = vld [vmem:[%s1276 + $0x32] sm:$0xff]
        %v1297 = vld [vmem:[%s1276 + $0x42] sm:$0xff]
        %v1298 = vld [vmem:[%s1276 + $0x52] sm:$0xff]
        %v1299 = vld [vmem:[%s1276 + $0x62] sm:$0xff]
        %v1300 = vld [vmem:[%s1276 + $0x72] sm:$0xff]
        %1309 = vrot.lane.b32.xlu0 %v1236, 8
        %v1310 = vpop.permute.xlu0 %1309
        %1311 = vrot.lane.b32.xlu0 %v1237, 8
        %v1312 = vpop.permute.xlu0 %1311
        %1313 = vrot.lane.b32.xlu0 %v1238, 8
        %v1314 = vpop.permute.xlu0 %1313
        %1315 = vrot.lane.b32.xlu0 %v1239, 8
        %v1316 = vpop.permute.xlu0 %1315
        %1317 = vrot.lane.b32.xlu0 %v1240, 8
        %v1318 = vpop.permute.xlu0 %1317
        %1319 = vrot.lane.b32.xlu0 %v1241, 8
        %v1320 = vpop.permute.xlu0 %1319
        %1321 = vrot.lane.b32.xlu0 %v1242, 8
        %v1322 = vpop.permute.xlu0 %1321
        %1323 = vrot.lane.b32.xlu0 %v1243, 8
        %v1324 = vpop.permute.xlu0 %1323
        %1341 = vrot.lane.b32.xlu0 %v1244, 16
        %v1342 = vpop.permute.xlu0 %1341
        %1343 = vrot.lane.b32.xlu0 %v1245, 16
        %v1344 = vpop.permute.xlu0 %1343
        %1345 = vrot.lane.b32.xlu0 %v1246, 16
        %v1346 = vpop.permute.xlu0 %1345
        %1347 = vrot.lane.b32.xlu0 %v1247, 16
        %v1348 = vpop.permute.xlu0 %1347
        %1349 = vrot.lane.b32.xlu0 %v1248, 16
        %v1350 = vpop.permute.xlu0 %1349
        %1351 = vrot.lane.b32.xlu0 %v1249, 16
        %v1352 = vpop.permute.xlu0 %1351
        %1353 = vrot.lane.b32.xlu0 %v1250, 16
        %v1354 = vpop.permute.xlu0 %1353
        %1355 = vrot.lane.b32.xlu0 %v1251, 16
        %v1356 = vpop.permute.xlu0 %1355
        %1373 = vrot.lane.b32.xlu0 %v1252, 24
        %v1374 = vpop.permute.xlu0 %1373
        %1375 = vrot.lane.b32.xlu0 %v1253, 24
        %v1376 = vpop.permute.xlu0 %1375
        %1377 = vrot.lane.b32.xlu0 %v1254, 24
        %v1378 = vpop.permute.xlu0 %1377
        %1379 = vrot.lane.b32.xlu0 %v1255, 24
        %v1380 = vpop.permute.xlu0 %1379
        %1381 = vrot.lane.b32.xlu0 %v1256, 24
        %v1382 = vpop.permute.xlu0 %1381
        %1383 = vrot.lane.b32.xlu0 %v1257, 24
        %v1384 = vpop.permute.xlu0 %1383
        %1385 = vrot.lane.b32.xlu0 %v1258, 24
        %v1386 = vpop.permute.xlu0 %1385
        %1387 = vrot.lane.b32.xlu0 %v1259, 24
        %v1388 = vpop.permute.xlu0 %1387
        %1405 = vrot.lane.b32.xlu0 %v1260, 32
        %v1406 = vpop.permute.xlu0 %1405
        %1407 = vrot.lane.b32.xlu0 %v1261, 32
        %v1408 = vpop.permute.xlu0 %1407
        %1409 = vrot.lane.b32.xlu0 %v1262, 32
        %v1410 = vpop.permute.xlu0 %1409
        %1411 = vrot.lane.b32.xlu0 %v1263, 32
        %v1412 = vpop.permute.xlu0 %1411
        %1413 = vrot.lane.b32.xlu0 %v1264, 32
        %v1414 = vpop.permute.xlu0 %1413
        %1415 = vrot.lane.b32.xlu0 %v1265, 32
        %v1416 = vpop.permute.xlu0 %1415
        %1417 = vrot.lane.b32.xlu0 %v1266, 32
        %v1418 = vpop.permute.xlu0 %1417
        %1419 = vrot.lane.b32.xlu0 %v1267, 32
        %v1420 = vpop.permute.xlu0 %1419
        %1437 = vrot.lane.b32.xlu0 %v1268, 40
        %v1438 = vpop.permute.xlu0 %1437
        %1439 = vrot.lane.b32.xlu0 %v1269, 40
        %v1440 = vpop.permute.xlu0 %1439
        %1441 = vrot.lane.b32.xlu0 %v1270, 40
        %v1442 = vpop.permute.xlu0 %1441
        %1443 = vrot.lane.b32.xlu0 %v1271, 40
        %v1444 = vpop.permute.xlu0 %1443
        %1445 = vrot.lane.b32.xlu0 %v1272, 40
        %v1446 = vpop.permute.xlu0 %1445
        %1447 = vrot.lane.b32.xlu0 %v1273, 40
        %v1448 = vpop.permute.xlu0 %1447
        %1449 = vrot.lane.b32.xlu0 %v1274, 40
        %v1450 = vpop.permute.xlu0 %1449
        %1451 = vrot.lane.b32.xlu0 %v1275, 40
        %v1452 = vpop.permute.xlu0 %1451
        %1469 = vrot.lane.b32.xlu0 %v1277, 48
        %v1470 = vpop.permute.xlu0 %1469
        %1471 = vrot.lane.b32.xlu0 %v1278, 48
        %v1472 = vpop.permute.xlu0 %1471
        %1473 = vrot.lane.b32.xlu0 %v1279, 48
        %v1474 = vpop.permute.xlu0 %1473
        %1475 = vrot.lane.b32.xlu0 %v1280, 48
        %v1476 = vpop.permute.xlu0 %1475
        %1477 = vrot.lane.b32.xlu0 %v1281, 48
        %v1478 = vpop.permute.xlu0 %1477
        %1479 = vrot.lane.b32.xlu0 %v1282, 48
        %v1480 = vpop.permute.xlu0 %1479
        %1481 = vrot.lane.b32.xlu0 %v1283, 48
        %v1482 = vpop.permute.xlu0 %1481
        %1483 = vrot.lane.b32.xlu0 %v1284, 48
        %v1484 = vpop.permute.xlu0 %1483
        %1501 = vrot.lane.b32.xlu0 %v1285, 56
        %v1502 = vpop.permute.xlu0 %1501
        %1503 = vrot.lane.b32.xlu0 %v1286, 56
        %v1504 = vpop.permute.xlu0 %1503
        %1505 = vrot.lane.b32.xlu0 %v1287, 56
        %v1506 = vpop.permute.xlu0 %1505
        %1507 = vrot.lane.b32.xlu0 %v1288, 56
        %v1508 = vpop.permute.xlu0 %1507
        %1509 = vrot.lane.b32.xlu0 %v1289, 56
        %v1510 = vpop.permute.xlu0 %1509
        %1511 = vrot.lane.b32.xlu0 %v1290, 56
        %v1512 = vpop.permute.xlu0 %1511
        %1513 = vrot.lane.b32.xlu0 %v1291, 56
        %v1514 = vpop.permute.xlu0 %1513
        %1515 = vrot.lane.b32.xlu0 %v1292, 56
        %v1516 = vpop.permute.xlu0 %1515
        %1533 = vrot.lane.b32.xlu0 %v1293, 64
        %v1534 = vpop.permute.xlu0 %1533
        %1535 = vrot.lane.b32.xlu0 %v1294, 64
        %v1536 = vpop.permute.xlu0 %1535
        %1537 = vrot.lane.b32.xlu0 %v1295, 64
        %v1538 = vpop.permute.xlu0 %1537
        %1539 = vrot.lane.b32.xlu0 %v1296, 64
        %v1540 = vpop.permute.xlu0 %1539
        %1541 = vrot.lane.b32.xlu0 %v1297, 64
        %v1542 = vpop.permute.xlu0 %1541
        %1543 = vrot.lane.b32.xlu0 %v1298, 64
        %v1544 = vpop.permute.xlu0 %1543
        %1545 = vrot.lane.b32.xlu0 %v1299, 64
        %v1546 = vpop.permute.xlu0 %1545
        %1547 = vrot.lane.b32.xlu0 %v1300, 64
        %v1548 = vpop.permute.xlu0 %1547
        %v1557 = vsel %vm1021, %v1228, %v1310
        %v1558 = vsel %vm1021, %v1229, %v1312
        %v1559 = vsel %vm1021, %v1230, %v1314
        %v1560 = vsel %vm1021, %v1231, %v1316
        %v1561 = vsel %vm1021, %v1232, %v1318
        %v1562 = vsel %vm1021, %v1233, %v1320
        %v1563 = vsel %vm1021, %v1234, %v1322
        %v1564 = vsel %vm1021, %v1235, %v1324
        %v1565 = vsel %vm1039, %v1557, %v1342
        %v1566 = vsel %vm1039, %v1558, %v1344
        %v1567 = vsel %vm1039, %v1559, %v1346
        %v1568 = vsel %vm1039, %v1560, %v1348
        %v1569 = vsel %vm1039, %v1561, %v1350
        %v1570 = vsel %vm1039, %v1562, %v1352
        %v1571 = vsel %vm1039, %v1563, %v1354
        %v1572 = vsel %vm1039, %v1564, %v1356
        %v1573 = vsel %vm1057, %v1565, %v1374
        %v1574 = vsel %vm1057, %v1566, %v1376
        %v1575 = vsel %vm1057, %v1567, %v1378
        %v1576 = vsel %vm1057, %v1568, %v1380
        %v1577 = vsel %vm1057, %v1569, %v1382
        %v1578 = vsel %vm1057, %v1570, %v1384
        %v1579 = vsel %vm1057, %v1571, %v1386
        %v1580 = vsel %vm1057, %v1572, %v1388
        %v1581 = vsel %vm1075, %v1573, %v1406
        %v1582 = vsel %vm1075, %v1574, %v1408
        %v1583 = vsel %vm1075, %v1575, %v1410
        %v1584 = vsel %vm1075, %v1576, %v1412
        %v1585 = vsel %vm1075, %v1577, %v1414
        %v1586 = vsel %vm1075, %v1578, %v1416
        %v1587 = vsel %vm1075, %v1579, %v1418
        %v1588 = vsel %vm1075, %v1580, %v1420
        %vm1589 = vcmask 326656
        %v1590 = vsel %vm1589, %v1581, %v1438
        %v1591 = vsel %vm1589, %v1582, %v1440
        %v1592 = vsel %vm1589, %v1583, %v1442
        %v1593 = vsel %vm1589, %v1584, %v1444
        %v1594 = vsel %vm1589, %v1585, %v1446
        %v1595 = vsel %vm1589, %v1586, %v1448
        %v1596 = vsel %vm1589, %v1587, %v1450
        %v1597 = vsel %vm1589, %v1588, %v1452
        %vm1598 = vcmask 392192
        %v1599 = vsel %vm1598, %v1590, %v1470
        %v1600 = vsel %vm1598, %v1591, %v1472
        %v1601 = vsel %vm1598, %v1592, %v1474
        %v1602 = vsel %vm1598, %v1593, %v1476
        %v1603 = vsel %vm1598, %v1594, %v1478
        %v1604 = vsel %vm1598, %v1595, %v1480
        %v1605 = vsel %vm1598, %v1596, %v1482
        %v1606 = vsel %vm1598, %v1597, %v1484
        %vm1607 = vcmask 457728
        %v1608 = vsel %vm1607, %v1599, %v1502
        %v1609 = vsel %vm1607, %v1600, %v1504
        %v1610 = vsel %vm1607, %v1601, %v1506
        %v1611 = vsel %vm1607, %v1602, %v1508
        %v1612 = vsel %vm1607, %v1603, %v1510
        %v1613 = vsel %vm1607, %v1604, %v1512
        %v1614 = vsel %vm1607, %v1605, %v1514
        %v1615 = vsel %vm1607, %v1606, %v1516
        %vm1616 = vcmask 523264
        %v1617 = vsel %vm1616, %v1608, %v1534
        %v1618 = vsel %vm1616, %v1609, %v1536
        %v1619 = vsel %vm1616, %v1610, %v1538
        %v1620 = vsel %vm1616, %v1611, %v1540
        %v1621 = vsel %vm1616, %v1612, %v1542
        %v1622 = vsel %vm1616, %v1613, %v1544
        %v1623 = vsel %vm1616, %v1614, %v1546
        %v1624 = vsel %vm1616, %v1615, %v1548
        %v1625 = vld [vmem:[%s6] sm:$0xff]
        %v1626 = vld [vmem:[%s6 + $0x8] sm:$0xff]
        %v1627 = vld [vmem:[%s6 + $0x10] sm:$0xff]
        %v1628 = vld [vmem:[%s6 + $0x18] sm:$0xff]
        %v1629 = vld [vmem:[%s6 + $0x20] sm:$0xff]
        %v1630 = vld [vmem:[%s6 + $0x28] sm:$0xff]
        %v1631 = vld [vmem:[%s6 + $0x30] sm:$0xff]
        %v1632 = vld [vmem:[%s6 + $0x38] sm:$0xff]
        %v1633 = vld [vmem:[%s6 + $0x40] sm:$0xff]
        %vm1634 = vcmask 588800
        %v1636 = vsel %vm1634, %v1617, 0
        %v1639 = vsel %vm1634, %v1618, 0
        %v1642 = vsel %vm1634, %v1619, 0
        %v1645 = vsel %vm1634, %v1620, 0
        %v1648 = vsel %vm1634, %v1621, 0
        %v1651 = vsel %vm1634, %v1622, 0
        %v1654 = vsel %vm1634, %v1623, 0
        %v1657 = vsel %vm1634, %v1624, 0
        %1659 = vmatpush.msra.mxu0 0.0
        %1660 = vmatpush.msra.mxu0 0.0
        %1661 = vmatpush.msra.mxu0 0.0
        %1662 = vmatpush.msra.mxu0 0.0
        %1663 = vmatpush.msra.mxu0 0.0
        %1664 = vmatpush.msra.mxu0 0.0
        %1665 = vmatpush.msra.mxu0 0.0
        %1666 = vmatpush.msra.mxu0 %v1633
        %1667 = vmatpush.msra.mxu0 %v1632
        %1668 = vmatpush.msra.mxu0 %v1631
        %1669 = vmatpush.msra.mxu0 %v1630
        %1670 = vmatpush.msra.mxu0 %v1629
        %1671 = vmatpush.msra.mxu0 %v1628
        %1672 = vmatpush.msra.mxu0 %v1627
        %1673 = vmatpush.msra.mxu0 %v1626
        %1674 = vmatpush.msra.mxu0 %v1625
        %1675 = vmatmul.f32.gmra.mxu0 %v1636
        %v1676 = vpop.f32.mrf.mxu0
        %v1677 = vadd.f32 0.0, %v1676
        %1678 = vmatmul.f32.gmra.mxu0 %v1639
        %v1679 = vpop.f32.mrf.mxu0
        %v1680 = vadd.f32 0.0, %v1679
        %1681 = vmatmul.f32.gmra.mxu0 %v1642
        %v1682 = vpop.f32.mrf.mxu0
        %v1683 = vadd.f32 0.0, %v1682
        %1684 = vmatmul.f32.gmra.mxu0 %v1645
        %v1685 = vpop.f32.mrf.mxu0
        %v1686 = vadd.f32 0.0, %v1685
        %1687 = vmatmul.f32.gmra.mxu0 %v1648
        %v1688 = vpop.f32.mrf.mxu0
        %v1689 = vadd.f32 0.0, %v1688
        %1690 = vmatmul.f32.gmra.mxu0 %v1651
        %v1691 = vpop.f32.mrf.mxu0
        %v1692 = vadd.f32 0.0, %v1691
        %1693 = vmatmul.f32.gmra.mxu0 %v1654
        %v1694 = vpop.f32.mrf.mxu0
        %v1695 = vadd.f32 0.0, %v1694
        %1696 = vmatmul.f32.gmra.mxu0 %v1657
        %v1697 = vpop.f32.mrf.mxu0
        %v1698 = vadd.f32 0.0, %v1697
        %1699 = vdwg.mxu0
        %v1701 = vsel %vm601, %v569, 0
        %v1704 = vsel %vm601, %v570, 0
        %v1707 = vsel %vm601, %v571, 0
        %v1710 = vsel %vm601, %v572, 0
        %v1713 = vsel %vm601, %v573, 0
        %v1716 = vsel %vm601, %v574, 0
        %v1719 = vsel %vm601, %v575, 0
        %v1722 = vsel %vm601, %v576, 0
        %v1725 = vsel %vm1114, %v1191, 0
        %1727 = vmatpush.msra.mxu0 0.0
        %1728 = vmatpush.msra.mxu0 0.0
        %1729 = vmatpush.msra.mxu0 0.0
        %1730 = vmatpush.msra.mxu0 0.0
        %1731 = vmatpush.msra.mxu0 0.0
        %1732 = vmatpush.msra.mxu0 0.0
        %1733 = vmatpush.msra.mxu0 0.0
        %1734 = vmatpush.msra.mxu0 0.0
        %1735 = vmatpush.msra.mxu0 0.0
        %1736 = vmatpush.msra.mxu0 0.0
        %1737 = vmatpush.msra.mxu0 0.0
        %1738 = vmatpush.msra.mxu0 0.0
        %1739 = vmatpush.msra.mxu0 0.0
        %1740 = vmatpush.msra.mxu0 0.0
        %1741 = vmatpush.msra.mxu0 0.0
        %1742 = vmatpush.msra.mxu0 %v1725
        %1743 = vmatmul.f32.gmra.mxu0 %v1701
        %v1744 = vpop.f32.mrf.mxu0
        %v1745 = vadd.f32 %v1677, %v1744
        %1746 = vmatmul.f32.gmra.mxu0 %v1704
        %v1747 = vpop.f32.mrf.mxu0
        %v1748 = vadd.f32 %v1680, %v1747
        %1749 = vmatmul.f32.gmra.mxu0 %v1707
        %v1750 = vpop.f32.mrf.mxu0
        %v1751 = vadd.f32 %v1683, %v1750
        %1752 = vmatmul.f32.gmra.mxu0 %v1710
        %v1753 = vpop.f32.mrf.mxu0
        %v1754 = vadd.f32 %v1686, %v1753
        %1755 = vmatmul.f32.gmra.mxu0 %v1713
        %v1756 = vpop.f32.mrf.mxu0
        %v1757 = vadd.f32 %v1689, %v1756
        %1758 = vmatmul.f32.gmra.mxu0 %v1716
        %v1759 = vpop.f32.mrf.mxu0
        %v1760 = vadd.f32 %v1692, %v1759
        %1761 = vmatmul.f32.gmra.mxu0 %v1719
        %v1762 = vpop.f32.mrf.mxu0
        %v1763 = vadd.f32 %v1695, %v1762
        %1764 = vmatmul.f32.gmra.mxu0 %v1722
        %v1765 = vpop.f32.mrf.mxu0
        %v1766 = vadd.f32 %v1698, %v1765
        %1767 = vdwg.mxu0
        %1768 = vst [vmem:[%s463] sm:$0xff] %v1745
        %1769 = vst [vmem:[%s463 + $0x8] sm:$0xff] %v1748
        %1770 = vst [vmem:[%s463 + $0x10] sm:$0xff] %v1751
        %1771 = vst [vmem:[%s463 + $0x18] sm:$0xff] %v1754
        %1772 = vst [vmem:[%s463 + $0x20] sm:$0xff] %v1757
        %1773 = vst [vmem:[%s463 + $0x28] sm:$0xff] %v1760
        %1774 = vst [vmem:[%s463 + $0x30] sm:$0xff] %v1763
        %1775 = vst [vmem:[%s463 + $0x38] sm:$0xff] %v1766
        %s1776 = sand.u32 %s203, 1
        %s1777 = scalar_lea.sflag [#allocation6], %s1776
        %s1778 = sand.u32 %s203, 1
        %s1779 = smul.addr %s1778, 64
        %s1780 = scalar_lea.vmem [#allocation5], %s1779
        // Predicated region
        $region91: #{tpu_custom_call.1} parent=85 // pred_check
          %p1781 = pneg %p213
        $region92: #{tpu_custom_call.1} parent=85 // pred_check_branch
          %1783 = sbr.rel (%p1781) target = $region94
        $region93: #{tpu_custom_call.1} parent=85 // pred_region
          %s1784 = smul.u32 8, %s22
          %1786 = vsyncadd %s1777, 0
          %s1787 = smul.addr %s1784, 8
          %s1788 = scalar_lea.hbm %s8, %s1787
          %s1789 = sshll.u32 %s1780, 4
          %s1790 = int_to_ptr.vmem [resolvable:$true] %s1789
          %s1791 = sshll.u32 %s1788, 4
          %s1792 = int_to_ptr.hbm [resolvable:$true] %s1791
          %1797 = dma.vmem_to_hbm [thread:$0]  %s1790, 1024, %s1792, %s1777, 128, 128, 8
        $region94: #{tpu_custom_call.1} parent=85 // pred_fallthru
          _
      $region86: #{tpu_custom_call.1} parent=5 // pred_fallthru
        _
      %p1798 = scmp.le.s32.totalorder 2, %s17
      // Predicated region
      $region95: #{tpu_custom_call.1} parent=5 // pred_check
        %p1799 = pneg %p1798
      $region96: #{tpu_custom_call.1} parent=5 // pred_check_branch
        %1801 = sbr.rel (%p1799) target = $region98
      $region97: #{tpu_custom_call.1} parent=5 // pred_region
        %s1802 = ssub.s32 %s17, 2
        // Predicated region
        $region99: #{tpu_custom_call.1} parent=97 // pred_check
          %p1803 = pneg %p219
        $region100: #{tpu_custom_call.1} parent=97 // pred_check_branch
          %1805 = sbr.rel (%p1803) target = $region102
        $region101: #{tpu_custom_call.1} parent=97 // pred_region
          %s1806 = sand.u32 %s204, 1
          %s1807 = scalar_lea.sflag [#allocation6], %s1806
          %s1808 = sand.u32 %s204, 1
          %s1809 = smul.addr %s1808, 64
          %s1810 = scalar_lea.vmem [#allocation5], %s1809
          %1812 = dma.done %s1807, 1024
        $region102: #{tpu_custom_call.1} parent=97 // pred_fallthru
          _
      $region98: #{tpu_custom_call.1} parent=5 // pred_fallthru
        _
    $region6: #{tpu_custom_call.1} parent=1 // loop_footer
      %s21 = sadd.s32 1, %s17
    $region7: #{tpu_custom_call.1} parent=1 // loop_footer_branch
      %16 = sbr.rel target = $region3
    $region8: #{tpu_custom_call.1} parent=1 // loop_exit
      _
    %1813 = vsyncpa [#allocation6], 1
    %s1814 = scalar_lea.sflag [#allocation6], 1
    %1815 = vsyncpa %s1814, 1

</llo_original>
